<compile_context>
chip_gen: v5e
topology: v5e:2x2
jax: 0.10.0
libtpu: 0.0.40
codegen_flags: <defaults>
</compile_context>

<pallas_src>
import functools

import jax
import jax.numpy as jnp
from jax import lax
from jax.experimental import pallas as pl
from jax.experimental.pallas import tpu as pltpu


# ----------------------------------------------------------------------------
# Kernel
# ----------------------------------------------------------------------------
def _mlp_kernel(x_ref, w_ref, rb_ref, o_ref, *, tF, token_chunk):
    """One (core-split c, ffn-tile k) grid step.

    Grid = (C, F // (C * tF)).  Axis 1 (ffn) is the reduction axis of the down
    projection; this core's output block index is constant along it, so o_ref
    (the per-core f32 partial, shape (S, H)) stays VMEM-resident and is used
    directly as the accumulator.  w_ref is one lane-dense fused weight slab
    per ffn tile, laid out [gate_k | up_k | down_k^T] of shape (H, 3*tF).
    """
    c = pl.program_id(0)
    k = pl.program_id(1)

    @pl.when(k == 0)
    def _():
        # dropout p == 0.0  =>  plain residual add; bias is already folded into
        # rb by the wrapper.  Only core-split 0 carries residual+bias; the
        # other core's partial starts at zero (partials are summed outside).
        o_ref[...] = jnp.where(c == 0, rb_ref[...], 0.0)

    # Loop-invariant weight tiles for this grid step (streamed once, low prec).
    wgu = w_ref[:, : 2 * tF]          # (H, 2*tF)  [gate | up], lane-aligned
    wdT = w_ref[:, 2 * tF:]           # (H, tF)    down_proj^T tile (lane-dense)

    n_chunks = o_ref.shape[0] // token_chunk

    def body(i, carry):
        off = pl.multiple_of(i * token_chunk, token_chunk)
        xc = x_ref[pl.ds(off, token_chunk), :]                        # (tc, H)
        # Single MXU dot for gate+up, f32 accumulation.
        gu = jnp.dot(xc, wgu, preferred_element_type=jnp.float32)     # (tc, 2tF)
        g = gu[:, :tF]
        u = gu[:, tF:]
        # SiLU(g) = g / (1 + exp(-g)); exp + approx reciprocal use the EUP
        # slot, which is otherwise idle in this bandwidth-bound kernel.
        h = (g * pl.reciprocal(1.0 + jnp.exp(-g), approx=True)) * u   # (tc, tF)
        # Down projection against the transposed tile (h @ wdT.T) so the weight
        # stream stays lane-dense (no lane-padded (tF, 16) block in VMEM).
        acc = lax.dot_general(
            h.astype(wdT.dtype), wdT,
            dimension_numbers=(((1,), (1,)), ((), ())),
            preferred_element_type=jnp.float32)                       # (tc, H)
        o_ref[pl.ds(off, token_chunk), :] += acc
        return carry

    lax.fori_loop(0, n_chunks, body, None, unroll=n_chunks <= 8)


# ----------------------------------------------------------------------------
# Generation-aware sizing helpers
# ----------------------------------------------------------------------------
def _device_kind():
    try:
        return jax.devices()[0].device_kind.lower()
    except Exception:  # pragma: no cover - defensive
        return ""


def _default_core_splits():
    # v7x has 2 TensorCores per chip: split the ffn/reduction range across
    # them (total weight traffic stays 1x; each core owns a partial output).
    # Splitting tokens instead would double chip HBM reads.
    return 2 if "v7" in _device_kind() else 1


def _tpu_budget():
    """(vmem_limit_bytes, per-step streaming budget in bytes)."""
    phys = None
    try:
        info = pltpu.get_tpu_info()
        for name in ("vmem_capacity_bytes", "vmem_size_bytes", "vmem_bytes"):
            v = getattr(info, name, None)
            if v:
                phys = int(v)
                break
    except Exception:  # pragma: no cover - defensive
        phys = None
    if phys is None:
        phys = 64 * 2**20 if "v7" in _device_kind() else 128 * 2**20
    if phys <= 64 * 2**20:
        # v7x: 64 MiB physical VMEM per TensorCore -> keep working set <= ~36 MiB.
        return 48 * 2**20, 36 * 2**20
    # v5e / v6e: 128 MiB physical VMEM -> use most of it.
    return 100 * 2**20, 80 * 2**20


def _choose_tf(F, core_splits, H, token_chunk, budget_bytes, wbytes, cap=65536):
    """Largest ffn tile (multiple of 128, dividing F, F//tF divisible by the
    core split) whose per-step working set fits the streaming budget:
        2 * 3*H*tF*wbytes      double-buffered fused weight slab
      + 12 * token_chunk*tF    f32 gate/up + silu*up intermediates per chunk
    """
    if F % 128 != 0:
        # TODO(synk): pad F up to a multiple of 128 (zero padding is exact here).
        raise ValueError(f"intermediate size {F} must be a multiple of 128")
    per_tf = 2 * 3 * H * wbytes + 12 * token_chunk
    max_tf = max(128, min(cap, F, budget_bytes // per_tf))
    m = F // 128

    def search(cs):
        best = None
        for d in range(1, m + 1):
            tf = d * 128
            if tf > max_tf:
                break
            if m % d == 0 and (F // tf) % cs == 0:
                best = tf
        return best

    best = search(core_splits)
    if best is None:
        best = search(1)
    return best if best is not None else 128


def _choose_token_chunk(S, max_chunk):
    if S <= max_chunk:
        return S
    best = None
    for tc in range(8, max_chunk + 1, 8):
        if S % tc == 0:
            best = tc
    return best if best is not None else S


# ----------------------------------------------------------------------------
# Factory: one-time weight packing + callable MLP
# ----------------------------------------------------------------------------
def make_telechat_mlp(wg, wu, wd, bias, *, tF=None, token_chunk=128,
                      weight_dtype=jnp.bfloat16, core_splits=None):
    """Packs the weights ONCE (hoisted out of the per-call path) and returns a
    callable mlp(hidden_states, residual) with the TelechatMLP forward
    semantics.  The packed slab is keyed on tF via this closure."""
    H, F = wg.shape
    assert wu.shape == (H, F) and wd.shape == (F, H) and bias.shape == (H,)

    if core_splits is None:
        core_splits = _default_core_splits()
    vmem_limit, budget = _tpu_budget()
    wbytes = jnp.dtype(weight_dtype).itemsize

    if tF is None:
        tF = _choose_tf(F, core_splits, H, token_chunk, budget, wbytes)
    assert F % tF == 0 and tF % 128 == 0, (F, tF)
    nk = F // tF
    C = core_splits if nk % core_splits == 0 else 1
    nk_pc = nk // C

    # ---- one-time weight prep: lane-dense fused slab, per-tile layout
    #      [gate_k | up_k | down_k^T] of width 3*tF ----
    wfused = jnp.concatenate(
        [wg.reshape(H, nk, tF),
         wu.reshape(H, nk, tF),
         wd.T.reshape(H, nk, tF)], axis=-1).reshape(H, 3 * F).astype(weight_dtype)
    bias_f32 = bias.astype(jnp.float32)

    def mlp(hidden_states, residual):
        orig_shape = hidden_states.shape
        assert orig_shape[-1] == H
        x = hidden_states.reshape(-1, H)
        r = residual.reshape(-1, H)
        S = x.shape[0]
        assert S % 8 == 0, "token count must be a multiple of 8"
        tc = _choose_token_chunk(S, token_chunk)

        # Minor cleanups (review): cast x to the streaming dtype once; fold the
        # bias into the residual outside the kernel (drops the (1, H) input).
        x_lp = x.astype(weight_dtype)
        rb = r.astype(jnp.float32) + bias_f32

        partials = pl.pallas_call(
            functools.partial(_mlp_kernel, tF=tF, token_chunk=tc),
            out_shape=jax.ShapeDtypeStruct((C, S, H), jnp.float32),
            grid_spec=pltpu.PrefetchScalarGridSpec(
                num_scalar_prefetch=0,
                grid=(C, nk_pc),
                in_specs=[
                    pl.BlockSpec((S, H), lambda c, k: (0, 0)),          # x
                    pl.BlockSpec((H, 3 * tF),
                                 lambda c, k: (0, c * nk_pc + k)),      # fused W
                    pl.BlockSpec((S, H), lambda c, k: (0, 0)),          # res+bias
                ],
                out_specs=pl.BlockSpec((None, S, H), lambda c, k: (c, 0, 0)),
            ),
            compiler_params=pltpu.CompilerParams(
                dimension_semantics=("parallel", "arbitrary"),
                vmem_limit_bytes=vmem_limit,
            ),
        )(x_lp, wfused, rb)

        out = partials[0] if C == 1 else partials.sum(axis=0)
        return out.astype(hidden_states.dtype).reshape(orig_shape)

    return mlp


# ----------------------------------------------------------------------------
# Demo / self-check
# ----------------------------------------------------------------------------
if __name__ == "__main__":
    H = 16          # hidden_size (module hard-codes 16)
    F = 4096        # synthetic intermediate size (reference uses 10_000_000)
    B, T = 2, 8     # batch, seq  -> 16 tokens

    key = jax.random.PRNGKey(0)
    k_x, k_r, k_g, k_u, k_d, k_b = jax.random.split(key, 6)

    hidden_states = jax.random.normal(k_x, (B, T, H), dtype=jnp.float32)
    residual = jax.random.normal(k_r, (B, T, H), dtype=jnp.float32)

    # Deterministic parameters (stored pre-transposed: y = x @ W).
    wg = jax.random.normal(k_g, (H, F), dtype=jnp.float32) * 0.05
    wu = jax.random.normal(k_u, (H, F), dtype=jnp.float32) * 0.05
    wd = jax.random.normal(k_d, (F, H), dtype=jnp.float32) * 0.05
    bias = jax.random.normal(k_b, (H,), dtype=jnp.float32) * 0.05

    xf = hidden_states.reshape(-1, H)
    rf = residual.reshape(-1, H)

    # Reference 1: same precision recipe as the kernel (bf16 weights, f32 acc).
    xb = xf.astype(jnp.bfloat16)
    g = jnp.dot(xb, wg.astype(jnp.bfloat16), preferred_element_type=jnp.float32)
    u = jnp.dot(xb, wu.astype(jnp.bfloat16), preferred_element_type=jnp.float32)
    hh = (g * jax.nn.sigmoid(g)) * u
    ref_bf16 = (jnp.dot(hh.astype(jnp.bfloat16), wd.astype(jnp.bfloat16),
                        preferred_element_type=jnp.float32)
                + bias + rf).reshape(B, T, H)

    # Reference 2: full-f32 math of the torch module.
    gf = xf @ wg
    uf = xf @ wu
    ref_f32 = (((gf * jax.nn.sigmoid(gf)) * uf) @ wd + bias + rf).reshape(B, T, H)

    # 1) Default config: auto tF sized to this generation's VMEM budget,
    #    weights packed once by the factory.
    mlp = make_telechat_mlp(wg, wu, wd, bias)
    out = jax.block_until_ready(mlp(hidden_states, residual))
    assert out.shape == hidden_states.shape
    assert jnp.allclose(out, ref_bf16, atol=5e-3, rtol=5e-3), \
        "default config: mismatch vs bf16-precision JAX reference"
    assert jnp.allclose(out, ref_f32, atol=5e-2, rtol=5e-2), \
        "default config: mismatch vs f32 JAX reference"

    # 2) Small tiles: exercises the multi-step ffn reduction (k-axis
    #    accumulation into the resident output) and the in-kernel token-chunk
    #    loop (token_chunk=8 -> 2 chunks of the 16 tokens).
    mlp_small = make_telechat_mlp(wg, wu, wd, bias, tF=512, token_chunk=8)
    out2 = jax.block_until_ready(mlp_small(hidden_states, residual))
    assert jnp.allclose(out2, ref_bf16, atol=5e-3, rtol=5e-3), \
        "small-tile config: mismatch vs bf16-precision JAX reference"
    assert jnp.allclose(out2, ref_f32, atol=5e-2, rtol=5e-2), \
        "small-tile config: mismatch vs f32 JAX reference"

    print("KERNEL_OK")
</pallas_src>

<mosaic_0001>
module attributes {stable_mosaic.version = 11 : i64} {
  func.func @_mlp_kernel(%arg0: i32, %arg1: i32, %arg2: memref<16x16xbf16, #tpu.memory_space<vmem>>, %arg3: memref<16x12288xbf16, #tpu.memory_space<vmem>>, %arg4: memref<16x16xf32, #tpu.memory_space<vmem>>, %arg5: memref<1x16x16xf32, #tpu.memory_space<vmem>>) attributes {dimension_semantics = [#tpu.dimension_semantics<parallel>, #tpu.dimension_semantics<arbitrary>], iteration_bounds = array<i64: 1, 1>, scalar_prefetch = 0 : i64, scratch_operands = 0 : i64, tpu.core_type = #tpu.core_type<tc>, window_params = [{pipeline_mode = #tpu.pipeline_mode<synchronous>, transform_indices = @transform_0, window_bounds = array<i64: 16, 16>}, {transform_indices = @transform_1, window_bounds = array<i64: 16, 12288>}, {pipeline_mode = #tpu.pipeline_mode<synchronous>, transform_indices = @transform_2, window_bounds = array<i64: 16, 16>}, {transform_indices = @transform_3, window_bounds = array<i64: 1, 16, 16>}]} {
    %c0_i32 = arith.constant 0 : i32
    %0 = arith.cmpi eq, %arg1, %c0_i32 : i32
    %1 = arith.extui %0 : i1 to i32
    %c0_i32_0 = arith.constant 0 : i32
    %2 = arith.cmpi ne, %1, %c0_i32_0 : i32
    scf.if %2 {
      %c0_i32_12 = arith.constant 0 : i32
      %30 = arith.cmpi eq, %arg0, %c0_i32_12 : i32
      %c0_13 = arith.constant 0 : index
      %c0_14 = arith.constant 0 : index
      %31 = vector.load %arg4[%c0_13, %c0_14] : memref<16x16xf32, #tpu.memory_space<vmem>>, vector<16x16xf32>
      %cst_15 = arith.constant 0.000000e+00 : f32
      %32 = vector.broadcast %cst_15 : f32 to vector<16x16xf32>
      %33 = arith.select %30, %31, %32 : vector<16x16xf32>
      %c0_16 = arith.constant 0 : index
      %c0_17 = arith.constant 0 : index
      %c0_18 = arith.constant 0 : index
      %34 = vector.load %arg5[%c0_16, %c0_17, %c0_18] : memref<1x16x16xf32, #tpu.memory_space<vmem>>, vector<1x16x16xf32>
      %35 = vector.shape_cast %34 : vector<1x16x16xf32> to vector<16x16xf32>
      %36 = vector.shape_cast %33 : vector<16x16xf32> to vector<1x16x16xf32>
      tpu.vector_store %arg5[%c0_16, %c0_17, %c0_18], %36 {strides = array<i32>} : memref<1x16x16xf32, #tpu.memory_space<vmem>>, vector<1x16x16xf32>,
    } else {
    }
    %c0 = arith.constant 0 : index
    %c0_1 = arith.constant 0 : index
    %3 = vector.load %arg3[%c0, %c0_1] : memref<16x12288xbf16, #tpu.memory_space<vmem>>, vector<16x8192xbf16>
    %c0_2 = arith.constant 0 : index
    %c8192 = arith.constant 8192 : index
    %4 = vector.load %arg3[%c0_2, %c8192] : memref<16x12288xbf16, #tpu.memory_space<vmem>>, vector<16x4096xbf16>
    %c0_i32_3 = arith.constant 0 : i32
    %c16_i32 = arith.constant 16 : i32
    %5 = arith.muli %c0_i32_3, %c16_i32 : i32
    %6 = tpu.assume_multiple %5, 16 : i32
    %7 = arith.index_cast %6 : i32 to index
    %c0_4 = arith.constant 0 : index
    %8 = vector.load %arg2[%7, %c0_4] : memref<16x16xbf16, #tpu.memory_space<vmem>>, vector<16x16xbf16>
    %cst = arith.constant dense<0.000000e+00> : vector<16x8192xf32>
    %9 = tpu.matmul %8, %3, %cst {dimension_numbers = #tpu.dot_dimension_numbers<[1], [0], [0], [1], [0, 0, 1, 1], [], []>} : vector<16x16xbf16>, vector<16x8192xbf16>, vector<16x8192xf32> -> vector<16x8192xf32>
    %10 = vector.extract_strided_slice %9 {offsets = [0, 0], sizes = [16, 4096], strides = [1, 1]} : vector<16x8192xf32> to vector<16x4096xf32>
    %11 = vector.extract_strided_slice %9 {offsets = [0, 4096], sizes = [16, 4096], strides = [1, 1]} : vector<16x8192xf32> to vector<16x4096xf32>
    %cst_5 = arith.constant 0.000000e+00 : f32
    %12 = vector.broadcast %cst_5 : f32 to vector<16x4096xf32>
    %13 = arith.subf %12, %10 : vector<16x4096xf32>
    %14 = math.exp %13 : vector<16x4096xf32>
    %cst_6 = arith.constant 1.000000e+00 : f32
    %15 = vector.broadcast %cst_6 : f32 to vector<16x4096xf32>
    %16 = arith.addf %15, %14 : vector<16x4096xf32>
    %17 = tpu.reciprocal %16 {approx = true} : vector<16x4096xf32> -> vector<16x4096xf32>
    %18 = arith.mulf %10, %17 : vector<16x4096xf32>
    %19 = arith.mulf %18, %11 : vector<16x4096xf32>
    %20 = arith.truncf %19 : vector<16x4096xf32> to vector<16x4096xbf16>
    %cst_7 = arith.constant dense<0.000000e+00> : vector<16x16xf32>
    %21 = tpu.matmul %20, %4, %cst_7 {dimension_numbers = #tpu.dot_dimension_numbers<[1], [1], [0], [0], [0, 0, 1, 0], [], []>} : vector<16x4096xbf16>, vector<16x4096xbf16>, vector<16x16xf32> -> vector<16x16xf32>
    %c0_8 = arith.constant 0 : index
    %22 = arith.index_cast %6 : i32 to index
    %c0_9 = arith.constant 0 : index
    %23 = vector.load %arg5[%c0_8, %22, %c0_9] : memref<1x16x16xf32, #tpu.memory_space<vmem>>, vector<1x16x16xf32>
    %24 = vector.shape_cast %23 : vector<1x16x16xf32> to vector<16x16xf32>
    %25 = arith.addf %24, %21 : vector<16x16xf32>
    %c0_10 = arith.constant 0 : index
    %26 = arith.index_cast %6 : i32 to index
    %c0_11 = arith.constant 0 : index
    %27 = vector.load %arg5[%c0_10, %26, %c0_11] : memref<1x16x16xf32, #tpu.memory_space<vmem>>, vector<1x16x16xf32>
    %28 = vector.shape_cast %27 : vector<1x16x16xf32> to vector<16x16xf32>
    %29 = vector.shape_cast %25 : vector<16x16xf32> to vector<1x16x16xf32>
    tpu.vector_store %arg5[%c0_10, %26, %c0_11], %29 {strides = array<i32>} : memref<1x16x16xf32, #tpu.memory_space<vmem>>, vector<1x16x16xf32>,
    %c1_i32 = arith.constant 1 : i32
    return
  }
  func.func @transform_0(%arg0: i32, %arg1: i32) -> (i32, i32) {
    %c0_i32 = arith.constant 0 : i32
    %c0_i32_0 = arith.constant 0 : i32
    %c0_i32_1 = arith.constant 0 : i32
    return %c0_i32, %c0_i32_0 : i32, i32
  }
  func.func @transform_1(%arg0: i32, %arg1: i32) -> (i32, i32) {
    %c1_i32 = arith.constant 1 : i32
    %0 = arith.muli %arg0, %c1_i32 : i32
    %1 = arith.addi %0, %arg1 : i32
    %c0_i32 = arith.constant 0 : i32
    %c0_i32_0 = arith.constant 0 : i32
    return %c0_i32, %1 : i32, i32
  }
  func.func @transform_2(%arg0: i32, %arg1: i32) -> (i32, i32) {
    %c0_i32 = arith.constant 0 : i32
    %c0_i32_0 = arith.constant 0 : i32
    %c0_i32_1 = arith.constant 0 : i32
    return %c0_i32, %c0_i32_0 : i32, i32
  }
  func.func @transform_3(%arg0: i32, %arg1: i32) -> (i32, i32, i32) {
    %c0_i32 = arith.constant 0 : i32
    %c0_i32_0 = arith.constant 0 : i32
    %c0_i32_1 = arith.constant 0 : i32
    return %arg0, %c0_i32, %c0_i32_0 : i32, i32, i32
  }
}

</mosaic_0001>

<llo_original>
// kernel: tpu_custom_call.1
$region0: #{tpu_custom_call.1}
  #allocation0 [shape = 'u32[]', space=smem, size = 0x4, offset = 0x4, fixed_abs, tag = 'smem constant byte address 0x4 - core index']
  #allocation1 [shape = 'u32[72,128]{1,0:T(1,128)}', space=vmem, size = 0x9000, scoped, tag = 'internal scratch']
  %s0 = inlined_call_operand.hbm [shape: bf16[16,16], index: 0, kind: input, shape index: {}]
  %s1 = inlined_call_operand.hbm [shape: bf16[16,12288], index: 1, kind: input, shape index: {}]
  %s2 = inlined_call_operand.hbm [shape: f32[16,16], index: 2, kind: input, shape index: {}]
  %s3 = inlined_call_operand.hbm [shape: f32[1,16,16], index: 3, kind: output, shape index: {}]
  %s4 = sld [smem:[#allocation0]]
  $region38: #{tpu_custom_call.1} parent=0
    _
  %s6 = ssub.s32 1, %s4
  %s7 = scalar_select 0, %s6, %s4
  $region1: #{tpu_custom_call.1} parent=0
    #allocation2 [shape = 'u8[4096]{0}', space=vmem, size = 0x1000, scoped, tag = 'input window, operand 0, single buffered']
    #allocation3 [shape = 's32[1]{0}', space=sflag, size = 0x4, scoped, tag = 'scoped memory for tpu_custom_call.1']
    #allocation4 [shape = 's32[1]{0}', space=sflag, size = 0x4, scoped, tag = 'scoped memory for tpu_custom_call.1']
    #allocation5 [shape = 'u8[393216]{0}', space=vmem, size = 0x60000, scoped, tag = 'input window, operand 1, single buffered']
    #allocation6 [shape = 's32[1]{0}', space=sflag, size = 0x4, scoped, tag = 'scoped memory for tpu_custom_call.1']
    #allocation7 [shape = 'u8[8192]{0}', space=vmem, size = 0x2000, scoped, tag = 'input window, operand 2, single buffered']
    #allocation8 [shape = 'u8[8192]{0}', space=vmem, size = 0x2000, scoped, tag = 'output window, operand 0, single buffered']
    %8 = vsyncpa [#allocation3], 0
    %9 = vsyncpa [#allocation6], 0
    %10 = vsyncpa [#allocation4], 0
    // Predicated region
    $region2: #{tpu_custom_call.1} parent=1 // pred_check
      _
    $region3: #{tpu_custom_call.1} parent=1 // pred_check_branch
      %12 = sbr.rel (0) target = $region5
    $region4: #{tpu_custom_call.1} parent=1 // pred_region
      %14 = vsyncadd [#allocation3], 0
      %s15 = sshll.u32 %s0, 4
      %s16 = int_to_ptr.hbm [resolvable:$true] %s15
      %s17 = sshll.u32 [#allocation2], 4
      %s18 = int_to_ptr.vmem [resolvable:$true] %s17
      %23 = dma.hbm_to_vmem [thread:$0]  %s16, 128, %s18, [#allocation3], 64, 64, 4
    $region5: #{tpu_custom_call.1} parent=1 // pred_fallthru
      _
    // Predicated region
    $region6: #{tpu_custom_call.1} parent=1 // pred_check
      _
    $region7: #{tpu_custom_call.1} parent=1 // pred_check_branch
      %25 = sbr.rel (0) target = $region9
    $region8: #{tpu_custom_call.1} parent=1 // pred_region
      %s26 = sadd.s32 0, 0
      %s27 = smul.u32 96, %s26
      %29 = vsyncadd [#allocation6], 0
      %s30 = smul.addr %s27, 4
      %s31 = scalar_lea.hbm %s1, %s30
      %s32 = sshll.u32 %s31, 4
      %s33 = int_to_ptr.hbm [resolvable:$true] %s32
      %s34 = sshll.u32 [#allocation5], 4
      %s35 = int_to_ptr.vmem [resolvable:$true] %s34
      %40 = dma.hbm_to_vmem [thread:$0]  %s33, 12288, %s35, [#allocation6], 6144, 6144, 384
    $region9: #{tpu_custom_call.1} parent=1 // pred_fallthru
      _
    // Predicated region
    $region10: #{tpu_custom_call.1} parent=1 // pred_check
      _
    $region11: #{tpu_custom_call.1} parent=1 // pred_check_branch
      %42 = sbr.rel (0) target = $region13
    $region12: #{tpu_custom_call.1} parent=1 // pred_region
      %44 = vsyncadd [#allocation6], 0
      %s45 = sshll.u32 %s2, 4
      %s46 = int_to_ptr.hbm [resolvable:$true] %s45
      %s47 = sshll.u32 [#allocation7], 4
      %s48 = int_to_ptr.vmem [resolvable:$true] %s47
      %53 = dma.hbm_to_vmem [thread:$0]  %s46, 256, %s48, [#allocation6], 128, 128, 8
    $region13: #{tpu_custom_call.1} parent=1 // pred_fallthru
      _
    // Predicated region
    $region14: #{tpu_custom_call.1} parent=1 // pred_check
      _
    $region15: #{tpu_custom_call.1} parent=1 // pred_check_branch
      %55 = sbr.rel (0) target = $region17
    $region16: #{tpu_custom_call.1} parent=1 // pred_region
      %57 = dma.done [#allocation3], 128
    $region17: #{tpu_custom_call.1} parent=1 // pred_fallthru
      _
    // Predicated region
    $region18: #{tpu_custom_call.1} parent=1 // pred_check
      _
    $region19: #{tpu_custom_call.1} parent=1 // pred_check_branch
      %59 = sbr.rel (0) target = $region21
    $region20: #{tpu_custom_call.1} parent=1 // pred_region
      %61 = dma.done [#allocation6], 12288
    $region21: #{tpu_custom_call.1} parent=1 // pred_fallthru
      _
    // Predicated region
    $region22: #{tpu_custom_call.1} parent=1 // pred_check
      _
    $region23: #{tpu_custom_call.1} parent=1 // pred_check_branch
      %63 = sbr.rel (0) target = $region25
    $region24: #{tpu_custom_call.1} parent=1 // pred_region
      %65 = dma.done [#allocation6], 256
    $region25: #{tpu_custom_call.1} parent=1 // pred_fallthru
      _
    %s66 = sadd.s32 0, 0
    %s67 = smul.u32 96, %s66
    %p69 = scmp.eq.s32.totalorder 0, 0
    // Predicated region
    $region26: #{tpu_custom_call.1} parent=1 // pred_check
      %p70 = pneg %p69
    $region27: #{tpu_custom_call.1} parent=1 // pred_check_branch
      %72 = sbr.rel (%p70) target = $region29
    $region28: #{tpu_custom_call.1} parent=1 // pred_region
      %p73 = scmp.eq.s32.totalorder 0, 0
      %v74 = vld [vmem:[#allocation7] sm:$0xff]
      %v75 = vld [vmem:[#allocation7 + $0x8] sm:$0xff]
      %s76 = scalar_select %p73, 1, 0
      %v77 = vstv %s76
      %vm78 = vcmp.eq.s32.totalorder %v77, 1
      %v79 = vsel %vm78, %v74, 0.0
      %v80 = vsel %vm78, %v75, 0.0
      %vm81 = vcmask 130048
      %82 = vst.msk [vmem:[#allocation8] sm:$0xff] %vm81, %v79
      %83 = vst.msk [vmem:[#allocation8 + $0x8] sm:$0xff] %vm81, %v80
    $region29: #{tpu_custom_call.1} parent=1 // pred_fallthru
      _
    %v84 = vld [vmem:[#allocation5] sm:$0xff]
    %v85 = vld [vmem:[#allocation5 + $0x8] sm:$0xff]
    %v86 = vld [vmem:[#allocation5 + $0x10] sm:$0xff]
    %v87 = vld [vmem:[#allocation5 + $0x18] sm:$0xff]
    %v88 = vld [vmem:[#allocation5 + $0x20] sm:$0xff]
    %v89 = vld [vmem:[#allocation5 + $0x28] sm:$0xff]
    %v90 = vld [vmem:[#allocation5 + $0x30] sm:$0xff]
    %v91 = vld [vmem:[#allocation5 + $0x38] sm:$0xff]
    %v92 = vld [vmem:[#allocation5 + $0x40] sm:$0xff]
    %v93 = vld [vmem:[#allocation5 + $0x48] sm:$0xff]
    %v94 = vld [vmem:[#allocation5 + $0x50] sm:$0xff]
    %v95 = vld [vmem:[#allocation5 + $0x58] sm:$0xff]
    %v96 = vld [vmem:[#allocation5 + $0x60] sm:$0xff]
    %v97 = vld [vmem:[#allocation5 + $0x68] sm:$0xff]
    %v98 = vld [vmem:[#allocation5 + $0x70] sm:$0xff]
    %v99 = vld [vmem:[#allocation5 + $0x78] sm:$0xff]
    %v100 = vld [vmem:[#allocation5 + $0x80] sm:$0xff]
    %v101 = vld [vmem:[#allocation5 + $0x88] sm:$0xff]
    %v102 = vld [vmem:[#allocation5 + $0x90] sm:$0xff]
    %v103 = vld [vmem:[#allocation5 + $0x98] sm:$0xff]
    %v104 = vld [vmem:[#allocation5 + $0xa0] sm:$0xff]
    %v105 = vld [vmem:[#allocation5 + $0xa8] sm:$0xff]
    %v106 = vld [vmem:[#allocation5 + $0xb0] sm:$0xff]
    %v107 = vld [vmem:[#allocation5 + $0xb8] sm:$0xff]
    %v108 = vld [vmem:[#allocation5 + $0xc0] sm:$0xff]
    %v109 = vld [vmem:[#allocation5 + $0xc8] sm:$0xff]
    %v110 = vld [vmem:[#allocation5 + $0xd0] sm:$0xff]
    %v111 = vld [vmem:[#allocation5 + $0xd8] sm:$0xff]
    %v112 = vld [vmem:[#allocation5 + $0xe0] sm:$0xff]
    %v113 = vld [vmem:[#allocation5 + $0xe8] sm:$0xff]
    %v114 = vld [vmem:[#allocation5 + $0xf0] sm:$0xff]
    %v115 = vld [vmem:[#allocation5 + $0xf8] sm:$0xff]
    %v116 = vld [vmem:[#allocation5 + $0x180] sm:$0xff]
    %v117 = vld [vmem:[#allocation5 + $0x188] sm:$0xff]
    %v118 = vld [vmem:[#allocation5 + $0x190] sm:$0xff]
    %v119 = vld [vmem:[#allocation5 + $0x198] sm:$0xff]
    %v120 = vld [vmem:[#allocation5 + $0x1a0] sm:$0xff]
    %v121 = vld [vmem:[#allocation5 + $0x1a8] sm:$0xff]
    %v122 = vld [vmem:[#allocation5 + $0x1b0] sm:$0xff]
    %v123 = vld [vmem:[#allocation5 + $0x1b8] sm:$0xff]
    %v124 = vld [vmem:[#allocation5 + $0x1c0] sm:$0xff]
    %v125 = vld [vmem:[#allocation5 + $0x1c8] sm:$0xff]
    %v126 = vld [vmem:[#allocation5 + $0x1d0] sm:$0xff]
    %v127 = vld [vmem:[#allocation5 + $0x1d8] sm:$0xff]
    %v128 = vld [vmem:[#allocation5 + $0x1e0] sm:$0xff]
    %v129 = vld [vmem:[#allocation5 + $0x1e8] sm:$0xff]
    %v130 = vld [vmem:[#allocation5 + $0x1f0] sm:$0xff]
    %v131 = vld [vmem:[#allocation5 + $0x1f8] sm:$0xff]
    %v132 = vld [vmem:[#allocation5 + $0x200] sm:$0xff]
    %v133 = vld [vmem:[#allocation5 + $0x208] sm:$0xff]
    %v134 = vld [vmem:[#allocation5 + $0x210] sm:$0xff]
    %v135 = vld [vmem:[#allocation5 + $0x218] sm:$0xff]
    %v136 = vld [vmem:[#allocation5 + $0x220] sm:$0xff]
    %v137 = vld [vmem:[#allocation5 + $0x228] sm:$0xff]
    %v138 = vld [vmem:[#allocation5 + $0x230] sm:$0xff]
    %v139 = vld [vmem:[#allocation5 + $0x238] sm:$0xff]
    %v140 = vld [vmem:[#allocation5 + $0x240] sm:$0xff]
    %v141 = vld [vmem:[#allocation5 + $0x248] sm:$0xff]
    %v142 = vld [vmem:[#allocation5 + $0x250] sm:$0xff]
    %v143 = vld [vmem:[#allocation5 + $0x258] sm:$0xff]
    %v144 = vld [vmem:[#allocation5 + $0x260] sm:$0xff]
    %v145 = vld [vmem:[#allocation5 + $0x268] sm:$0xff]
    %v146 = vld [vmem:[#allocation5 + $0x270] sm:$0xff]
    %v147 = vld [vmem:[#allocation5 + $0x278] sm:$0xff]
    %v148 = vld [vmem:[#allocation5 + $0x100] sm:$0xff]
    %v149 = vld [vmem:[#allocation5 + $0x108] sm:$0xff]
    %v150 = vld [vmem:[#allocation5 + $0x110] sm:$0xff]
    %v151 = vld [vmem:[#allocation5 + $0x118] sm:$0xff]
    %v152 = vld [vmem:[#allocation5 + $0x120] sm:$0xff]
    %v153 = vld [vmem:[#allocation5 + $0x128] sm:$0xff]
    %v154 = vld [vmem:[#allocation5 + $0x130] sm:$0xff]
    %v155 = vld [vmem:[#allocation5 + $0x138] sm:$0xff]
    %v156 = vld [vmem:[#allocation5 + $0x140] sm:$0xff]
    %v157 = vld [vmem:[#allocation5 + $0x148] sm:$0xff]
    %v158 = vld [vmem:[#allocation5 + $0x150] sm:$0xff]
    %v159 = vld [vmem:[#allocation5 + $0x158] sm:$0xff]
    %v160 = vld [vmem:[#allocation5 + $0x160] sm:$0xff]
    %v161 = vld [vmem:[#allocation5 + $0x168] sm:$0xff]
    %v162 = vld [vmem:[#allocation5 + $0x170] sm:$0xff]
    %v163 = vld [vmem:[#allocation5 + $0x178] sm:$0xff]
    %v164 = vld [vmem:[#allocation5 + $0x280] sm:$0xff]
    %v165 = vld [vmem:[#allocation5 + $0x288] sm:$0xff]
    %v166 = vld [vmem:[#allocation5 + $0x290] sm:$0xff]
    %v167 = vld [vmem:[#allocation5 + $0x298] sm:$0xff]
    %v168 = vld [vmem:[#allocation5 + $0x2a0] sm:$0xff]
    %v169 = vld [vmem:[#allocation5 + $0x2a8] sm:$0xff]
    %v170 = vld [vmem:[#allocation5 + $0x2b0] sm:$0xff]
    %v171 = vld [vmem:[#allocation5 + $0x2b8] sm:$0xff]
    %v172 = vld [vmem:[#allocation5 + $0x2c0] sm:$0xff]
    %v173 = vld [vmem:[#allocation5 + $0x2c8] sm:$0xff]
    %v174 = vld [vmem:[#allocation5 + $0x2d0] sm:$0xff]
    %v175 = vld [vmem:[#allocation5 + $0x2d8] sm:$0xff]
    %v176 = vld [vmem:[#allocation5 + $0x2e0] sm:$0xff]
    %v177 = vld [vmem:[#allocation5 + $0x2e8] sm:$0xff]
    %v178 = vld [vmem:[#allocation5 + $0x2f0] sm:$0xff]
    %v179 = vld [vmem:[#allocation5 + $0x2f8] sm:$0xff]
    %v180 = vld [vmem:[#allocation2] sm:$0xf]
    %v181 = vld [vmem:[#allocation2 + $0x4] sm:$0xf]
    %v184 = vunpack.c.l.b16 %v180
    %v185 = vunpack.c.l.b16 %v181
    %v186 = vpack.c.b16 %v185, %v184
    %v251 = vunpack.c.l.b16 %v84
    %v252 = vunpack.c.h.b16 %v84
    %v253 = vunpack.c.l.b16 %v85
    %v254 = vunpack.c.h.b16 %v85
    %v255 = vunpack.c.l.b16 %v86
    %v256 = vunpack.c.h.b16 %v86
    %v257 = vunpack.c.l.b16 %v87
    %v258 = vunpack.c.h.b16 %v87
    %v259 = vunpack.c.l.b16 %v88
    %v260 = vunpack.c.h.b16 %v88
    %v261 = vunpack.c.l.b16 %v89
    %v262 = vunpack.c.h.b16 %v89
    %v263 = vunpack.c.l.b16 %v90
    %v264 = vunpack.c.h.b16 %v90
    %v265 = vunpack.c.l.b16 %v91
    %v266 = vunpack.c.h.b16 %v91
    %v267 = vunpack.c.l.b16 %v92
    %v268 = vunpack.c.h.b16 %v92
    %v269 = vunpack.c.l.b16 %v93
    %v270 = vunpack.c.h.b16 %v93
    %v271 = vunpack.c.l.b16 %v94
    %v272 = vunpack.c.h.b16 %v94
    %v273 = vunpack.c.l.b16 %v95
    %v274 = vunpack.c.h.b16 %v95
    %v275 = vunpack.c.l.b16 %v96
    %v276 = vunpack.c.h.b16 %v96
    %v277 = vunpack.c.l.b16 %v97
    %v278 = vunpack.c.h.b16 %v97
    %v279 = vunpack.c.l.b16 %v98
    %v280 = vunpack.c.h.b16 %v98
    %v281 = vunpack.c.l.b16 %v99
    %v282 = vunpack.c.h.b16 %v99
    %v283 = vunpack.c.l.b16 %v100
    %v284 = vunpack.c.h.b16 %v100
    %v285 = vunpack.c.l.b16 %v101
    %v286 = vunpack.c.h.b16 %v101
    %v287 = vunpack.c.l.b16 %v102
    %v288 = vunpack.c.h.b16 %v102
    %v289 = vunpack.c.l.b16 %v103
    %v290 = vunpack.c.h.b16 %v103
    %v291 = vunpack.c.l.b16 %v104
    %v292 = vunpack.c.h.b16 %v104
    %v293 = vunpack.c.l.b16 %v105
    %v294 = vunpack.c.h.b16 %v105
    %v295 = vunpack.c.l.b16 %v106
    %v296 = vunpack.c.h.b16 %v106
    %v297 = vunpack.c.l.b16 %v107
    %v298 = vunpack.c.h.b16 %v107
    %v299 = vunpack.c.l.b16 %v108
    %v300 = vunpack.c.h.b16 %v108
    %v301 = vunpack.c.l.b16 %v109
    %v302 = vunpack.c.h.b16 %v109
    %v303 = vunpack.c.l.b16 %v110
    %v304 = vunpack.c.h.b16 %v110
    %v305 = vunpack.c.l.b16 %v111
    %v306 = vunpack.c.h.b16 %v111
    %v307 = vunpack.c.l.b16 %v112
    %v308 = vunpack.c.h.b16 %v112
    %v309 = vunpack.c.l.b16 %v113
    %v310 = vunpack.c.h.b16 %v113
    %v311 = vunpack.c.l.b16 %v114
    %v312 = vunpack.c.h.b16 %v114
    %v313 = vunpack.c.l.b16 %v115
    %v314 = vunpack.c.h.b16 %v115
    %v315 = vunpack.c.l.b16 %v116
    %v316 = vunpack.c.h.b16 %v116
    %v317 = vunpack.c.l.b16 %v117
    %v318 = vunpack.c.h.b16 %v117
    %v319 = vunpack.c.l.b16 %v118
    %v320 = vunpack.c.h.b16 %v118
    %v321 = vunpack.c.l.b16 %v119
    %v322 = vunpack.c.h.b16 %v119
    %v323 = vunpack.c.l.b16 %v120
    %v324 = vunpack.c.h.b16 %v120
    %v325 = vunpack.c.l.b16 %v121
    %v326 = vunpack.c.h.b16 %v121
    %v327 = vunpack.c.l.b16 %v122
    %v328 = vunpack.c.h.b16 %v122
    %v329 = vunpack.c.l.b16 %v123
    %v330 = vunpack.c.h.b16 %v123
    %v331 = vunpack.c.l.b16 %v124
    %v332 = vunpack.c.h.b16 %v124
    %v333 = vunpack.c.l.b16 %v125
    %v334 = vunpack.c.h.b16 %v125
    %v335 = vunpack.c.l.b16 %v126
    %v336 = vunpack.c.h.b16 %v126
    %v337 = vunpack.c.l.b16 %v127
    %v338 = vunpack.c.h.b16 %v127
    %v339 = vunpack.c.l.b16 %v128
    %v340 = vunpack.c.h.b16 %v128
    %v341 = vunpack.c.l.b16 %v129
    %v342 = vunpack.c.h.b16 %v129
    %v343 = vunpack.c.l.b16 %v130
    %v344 = vunpack.c.h.b16 %v130
    %v345 = vunpack.c.l.b16 %v131
    %v346 = vunpack.c.h.b16 %v131
    %v347 = vunpack.c.l.b16 %v132
    %v348 = vunpack.c.h.b16 %v132
    %v349 = vunpack.c.l.b16 %v133
    %v350 = vunpack.c.h.b16 %v133
    %v351 = vunpack.c.l.b16 %v134
    %v352 = vunpack.c.h.b16 %v134
    %v353 = vunpack.c.l.b16 %v135
    %v354 = vunpack.c.h.b16 %v135
    %v355 = vunpack.c.l.b16 %v136
    %v356 = vunpack.c.h.b16 %v136
    %v357 = vunpack.c.l.b16 %v137
    %v358 = vunpack.c.h.b16 %v137
    %v359 = vunpack.c.l.b16 %v138
    %v360 = vunpack.c.h.b16 %v138
    %v361 = vunpack.c.l.b16 %v139
    %v362 = vunpack.c.h.b16 %v139
    %v363 = vunpack.c.l.b16 %v140
    %v364 = vunpack.c.h.b16 %v140
    %v365 = vunpack.c.l.b16 %v141
    %v366 = vunpack.c.h.b16 %v141
    %v367 = vunpack.c.l.b16 %v142
    %v368 = vunpack.c.h.b16 %v142
    %v369 = vunpack.c.l.b16 %v143
    %v370 = vunpack.c.h.b16 %v143
    %v371 = vunpack.c.l.b16 %v144
    %v372 = vunpack.c.h.b16 %v144
    %v373 = vunpack.c.l.b16 %v145
    %v374 = vunpack.c.h.b16 %v145
    %v375 = vunpack.c.l.b16 %v146
    %v376 = vunpack.c.h.b16 %v146
    %v377 = vunpack.c.l.b16 %v147
    %v378 = vunpack.c.h.b16 %v147
    %v379 = vpack.c.b16 %v315, %v251
    %v380 = vpack.c.b16 %v316, %v252
    %v381 = vpack.c.b16 %v317, %v253
    %v382 = vpack.c.b16 %v318, %v254
    %v383 = vpack.c.b16 %v319, %v255
    %v384 = vpack.c.b16 %v320, %v256
    %v385 = vpack.c.b16 %v321, %v257
    %v386 = vpack.c.b16 %v322, %v258
    %v387 = vpack.c.b16 %v323, %v259
    %v388 = vpack.c.b16 %v324, %v260
    %v389 = vpack.c.b16 %v325, %v261
    %v390 = vpack.c.b16 %v326, %v262
    %v391 = vpack.c.b16 %v327, %v263
    %v392 = vpack.c.b16 %v328, %v264
    %v393 = vpack.c.b16 %v329, %v265
    %v394 = vpack.c.b16 %v330, %v266
    %v395 = vpack.c.b16 %v331, %v267
    %v396 = vpack.c.b16 %v332, %v268
    %v397 = vpack.c.b16 %v333, %v269
    %v398 = vpack.c.b16 %v334, %v270
    %v399 = vpack.c.b16 %v335, %v271
    %v400 = vpack.c.b16 %v336, %v272
    %v401 = vpack.c.b16 %v337, %v273
    %v402 = vpack.c.b16 %v338, %v274
    %v403 = vpack.c.b16 %v339, %v275
    %v404 = vpack.c.b16 %v340, %v276
    %v405 = vpack.c.b16 %v341, %v277
    %v406 = vpack.c.b16 %v342, %v278
    %v407 = vpack.c.b16 %v343, %v279
    %v408 = vpack.c.b16 %v344, %v280
    %v409 = vpack.c.b16 %v345, %v281
    %v410 = vpack.c.b16 %v346, %v282
    %v411 = vpack.c.b16 %v347, %v283
    %v412 = vpack.c.b16 %v348, %v284
    %v413 = vpack.c.b16 %v349, %v285
    %v414 = vpack.c.b16 %v350, %v286
    %v415 = vpack.c.b16 %v351, %v287
    %v416 = vpack.c.b16 %v352, %v288
    %v417 = vpack.c.b16 %v353, %v289
    %v418 = vpack.c.b16 %v354, %v290
    %v419 = vpack.c.b16 %v355, %v291
    %v420 = vpack.c.b16 %v356, %v292
    %v421 = vpack.c.b16 %v357, %v293
    %v422 = vpack.c.b16 %v358, %v294
    %v423 = vpack.c.b16 %v359, %v295
    %v424 = vpack.c.b16 %v360, %v296
    %v425 = vpack.c.b16 %v361, %v297
    %v426 = vpack.c.b16 %v362, %v298
    %v427 = vpack.c.b16 %v363, %v299
    %v428 = vpack.c.b16 %v364, %v300
    %v429 = vpack.c.b16 %v365, %v301
    %v430 = vpack.c.b16 %v366, %v302
    %v431 = vpack.c.b16 %v367, %v303
    %v432 = vpack.c.b16 %v368, %v304
    %v433 = vpack.c.b16 %v369, %v305
    %v434 = vpack.c.b16 %v370, %v306
    %v435 = vpack.c.b16 %v371, %v307
    %v436 = vpack.c.b16 %v372, %v308
    %v437 = vpack.c.b16 %v373, %v309
    %v438 = vpack.c.b16 %v374, %v310
    %v439 = vpack.c.b16 %v375, %v311
    %v440 = vpack.c.b16 %v376, %v312
    %v441 = vpack.c.b16 %v377, %v313
    %v442 = vpack.c.b16 %v378, %v314
    %vm507 = vcmask 130048
    %v509 = vsel %vm507, %v186, 0
    %511 = vmatpush.bf16.msra.mxu0 0
    %512 = vmatpush.bf16.msra.mxu0 0
    %513 = vmatpush.bf16.msra.mxu0 0
    %514 = vmatpush.bf16.msra.mxu0 0
    %515 = vmatpush.bf16.msra.mxu0 0
    %516 = vmatpush.bf16.msra.mxu0 0
    %517 = vmatpush.bf16.msra.mxu0 0
    %518 = vmatpush.bf16.msra.mxu0 %v379
    %519 = vmatmul.bf16.gmra.mxu0 %v509
    %v520 = vpop.f32.mrf.mxu0
    %v521 = vadd.f32 0.0, %v520
    %v522 = vpop.f32.mrf.mxu0
    %v523 = vadd.f32 0.0, %v522
    %524 = vdwg.mxu0
    %525 = vmatpush.bf16.msra.mxu0 0
    %526 = vmatpush.bf16.msra.mxu0 0
    %527 = vmatpush.bf16.msra.mxu0 0
    %528 = vmatpush.bf16.msra.mxu0 0
    %529 = vmatpush.bf16.msra.mxu0 0
    %530 = vmatpush.bf16.msra.mxu0 0
    %531 = vmatpush.bf16.msra.mxu0 0
    %532 = vmatpush.bf16.msra.mxu0 %v380
    %533 = vmatmul.bf16.gmra.mxu0 %v509
    %v534 = vpop.f32.mrf.mxu0
    %v535 = vadd.f32 0.0, %v534
    %v536 = vpop.f32.mrf.mxu0
    %v537 = vadd.f32 0.0, %v536
    %538 = vdwg.mxu0
    %539 = vmatpush.bf16.msra.mxu0 0
    %540 = vmatpush.bf16.msra.mxu0 0
    %541 = vmatpush.bf16.msra.mxu0 0
    %542 = vmatpush.bf16.msra.mxu0 0
    %543 = vmatpush.bf16.msra.mxu0 0
    %544 = vmatpush.bf16.msra.mxu0 0
    %545 = vmatpush.bf16.msra.mxu0 0
    %546 = vmatpush.bf16.msra.mxu0 %v381
    %547 = vmatmul.bf16.gmra.mxu0 %v509
    %v548 = vpop.f32.mrf.mxu0
    %v549 = vadd.f32 0.0, %v548
    %v550 = vpop.f32.mrf.mxu0
    %v551 = vadd.f32 0.0, %v550
    %552 = vdwg.mxu0
    %553 = vmatpush.bf16.msra.mxu0 0
    %554 = vmatpush.bf16.msra.mxu0 0
    %555 = vmatpush.bf16.msra.mxu0 0
    %556 = vmatpush.bf16.msra.mxu0 0
    %557 = vmatpush.bf16.msra.mxu0 0
    %558 = vmatpush.bf16.msra.mxu0 0
    %559 = vmatpush.bf16.msra.mxu0 0
    %560 = vmatpush.bf16.msra.mxu0 %v382
    %561 = vmatmul.bf16.gmra.mxu0 %v509
    %v562 = vpop.f32.mrf.mxu0
    %v563 = vadd.f32 0.0, %v562
    %v564 = vpop.f32.mrf.mxu0
    %v565 = vadd.f32 0.0, %v564
    %566 = vdwg.mxu0
    %567 = vmatpush.bf16.msra.mxu0 0
    %568 = vmatpush.bf16.msra.mxu0 0
    %569 = vmatpush.bf16.msra.mxu0 0
    %570 = vmatpush.bf16.msra.mxu0 0
    %571 = vmatpush.bf16.msra.mxu0 0
    %572 = vmatpush.bf16.msra.mxu0 0
    %573 = vmatpush.bf16.msra.mxu0 0
    %574 = vmatpush.bf16.msra.mxu0 %v383
    %575 = vmatmul.bf16.gmra.mxu0 %v509
    %v576 = vpop.f32.mrf.mxu0
    %v577 = vadd.f32 0.0, %v576
    %v578 = vpop.f32.mrf.mxu0
    %v579 = vadd.f32 0.0, %v578
    %580 = vdwg.mxu0
    %581 = vmatpush.bf16.msra.mxu0 0
    %582 = vmatpush.bf16.msra.mxu0 0
    %583 = vmatpush.bf16.msra.mxu0 0
    %584 = vmatpush.bf16.msra.mxu0 0
    %585 = vmatpush.bf16.msra.mxu0 0
    %586 = vmatpush.bf16.msra.mxu0 0
    %587 = vmatpush.bf16.msra.mxu0 0
    %588 = vmatpush.bf16.msra.mxu0 %v384
    %589 = vmatmul.bf16.gmra.mxu0 %v509
    %v590 = vpop.f32.mrf.mxu0
    %v591 = vadd.f32 0.0, %v590
    %v592 = vpop.f32.mrf.mxu0
    %v593 = vadd.f32 0.0, %v592
    %594 = vdwg.mxu0
    %595 = vmatpush.bf16.msra.mxu0 0
    %596 = vmatpush.bf16.msra.mxu0 0
    %597 = vmatpush.bf16.msra.mxu0 0
    %598 = vmatpush.bf16.msra.mxu0 0
    %599 = vmatpush.bf16.msra.mxu0 0
    %600 = vmatpush.bf16.msra.mxu0 0
    %601 = vmatpush.bf16.msra.mxu0 0
    %602 = vmatpush.bf16.msra.mxu0 %v385
    %603 = vmatmul.bf16.gmra.mxu0 %v509
    %v604 = vpop.f32.mrf.mxu0
    %v605 = vadd.f32 0.0, %v604
    %v606 = vpop.f32.mrf.mxu0
    %v607 = vadd.f32 0.0, %v606
    %608 = vdwg.mxu0
    %609 = vmatpush.bf16.msra.mxu0 0
    %610 = vmatpush.bf16.msra.mxu0 0
    %611 = vmatpush.bf16.msra.mxu0 0
    %612 = vmatpush.bf16.msra.mxu0 0
    %613 = vmatpush.bf16.msra.mxu0 0
    %614 = vmatpush.bf16.msra.mxu0 0
    %615 = vmatpush.bf16.msra.mxu0 0
    %616 = vmatpush.bf16.msra.mxu0 %v386
    %617 = vmatmul.bf16.gmra.mxu0 %v509
    %v618 = vpop.f32.mrf.mxu0
    %v619 = vadd.f32 0.0, %v618
    %v620 = vpop.f32.mrf.mxu0
    %v621 = vadd.f32 0.0, %v620
    %622 = vdwg.mxu0
    %623 = vmatpush.bf16.msra.mxu0 0
    %624 = vmatpush.bf16.msra.mxu0 0
    %625 = vmatpush.bf16.msra.mxu0 0
    %626 = vmatpush.bf16.msra.mxu0 0
    %627 = vmatpush.bf16.msra.mxu0 0
    %628 = vmatpush.bf16.msra.mxu0 0
    %629 = vmatpush.bf16.msra.mxu0 0
    %630 = vmatpush.bf16.msra.mxu0 %v387
    %631 = vmatmul.bf16.gmra.mxu0 %v509
    %v632 = vpop.f32.mrf.mxu0
    %v633 = vadd.f32 0.0, %v632
    %v634 = vpop.f32.mrf.mxu0
    %v635 = vadd.f32 0.0, %v634
    %636 = vdwg.mxu0
    %637 = vmatpush.bf16.msra.mxu0 0
    %638 = vmatpush.bf16.msra.mxu0 0
    %639 = vmatpush.bf16.msra.mxu0 0
    %640 = vmatpush.bf16.msra.mxu0 0
    %641 = vmatpush.bf16.msra.mxu0 0
    %642 = vmatpush.bf16.msra.mxu0 0
    %643 = vmatpush.bf16.msra.mxu0 0
    %644 = vmatpush.bf16.msra.mxu0 %v388
    %645 = vmatmul.bf16.gmra.mxu0 %v509
    %v646 = vpop.f32.mrf.mxu0
    %v647 = vadd.f32 0.0, %v646
    %v648 = vpop.f32.mrf.mxu0
    %v649 = vadd.f32 0.0, %v648
    %650 = vdwg.mxu0
    %651 = vmatpush.bf16.msra.mxu0 0
    %652 = vmatpush.bf16.msra.mxu0 0
    %653 = vmatpush.bf16.msra.mxu0 0
    %654 = vmatpush.bf16.msra.mxu0 0
    %655 = vmatpush.bf16.msra.mxu0 0
    %656 = vmatpush.bf16.msra.mxu0 0
    %657 = vmatpush.bf16.msra.mxu0 0
    %658 = vmatpush.bf16.msra.mxu0 %v389
    %659 = vmatmul.bf16.gmra.mxu0 %v509
    %v660 = vpop.f32.mrf.mxu0
    %v661 = vadd.f32 0.0, %v660
    %v662 = vpop.f32.mrf.mxu0
    %v663 = vadd.f32 0.0, %v662
    %664 = vdwg.mxu0
    %665 = vmatpush.bf16.msra.mxu0 0
    %666 = vmatpush.bf16.msra.mxu0 0
    %667 = vmatpush.bf16.msra.mxu0 0
    %668 = vmatpush.bf16.msra.mxu0 0
    %669 = vmatpush.bf16.msra.mxu0 0
    %670 = vmatpush.bf16.msra.mxu0 0
    %671 = vmatpush.bf16.msra.mxu0 0
    %672 = vmatpush.bf16.msra.mxu0 %v390
    %673 = vmatmul.bf16.gmra.mxu0 %v509
    %v674 = vpop.f32.mrf.mxu0
    %v675 = vadd.f32 0.0, %v674
    %v676 = vpop.f32.mrf.mxu0
    %v677 = vadd.f32 0.0, %v676
    %678 = vdwg.mxu0
    %679 = vmatpush.bf16.msra.mxu0 0
    %680 = vmatpush.bf16.msra.mxu0 0
    %681 = vmatpush.bf16.msra.mxu0 0
    %682 = vmatpush.bf16.msra.mxu0 0
    %683 = vmatpush.bf16.msra.mxu0 0
    %684 = vmatpush.bf16.msra.mxu0 0
    %685 = vmatpush.bf16.msra.mxu0 0
    %686 = vmatpush.bf16.msra.mxu0 %v391
    %687 = vmatmul.bf16.gmra.mxu0 %v509
    %v688 = vpop.f32.mrf.mxu0
    %v689 = vadd.f32 0.0, %v688
    %v690 = vpop.f32.mrf.mxu0
    %v691 = vadd.f32 0.0, %v690
    %692 = vdwg.mxu0
    %693 = vmatpush.bf16.msra.mxu0 0
    %694 = vmatpush.bf16.msra.mxu0 0
    %695 = vmatpush.bf16.msra.mxu0 0
    %696 = vmatpush.bf16.msra.mxu0 0
    %697 = vmatpush.bf16.msra.mxu0 0
    %698 = vmatpush.bf16.msra.mxu0 0
    %699 = vmatpush.bf16.msra.mxu0 0
    %700 = vmatpush.bf16.msra.mxu0 %v392
    %701 = vmatmul.bf16.gmra.mxu0 %v509
    %v702 = vpop.f32.mrf.mxu0
    %v703 = vadd.f32 0.0, %v702
    %v704 = vpop.f32.mrf.mxu0
    %v705 = vadd.f32 0.0, %v704
    %706 = vdwg.mxu0
    %707 = vmatpush.bf16.msra.mxu0 0
    %708 = vmatpush.bf16.msra.mxu0 0
    %709 = vmatpush.bf16.msra.mxu0 0
    %710 = vmatpush.bf16.msra.mxu0 0
    %711 = vmatpush.bf16.msra.mxu0 0
    %712 = vmatpush.bf16.msra.mxu0 0
    %713 = vmatpush.bf16.msra.mxu0 0
    %714 = vmatpush.bf16.msra.mxu0 %v393
    %715 = vmatmul.bf16.gmra.mxu0 %v509
    %v716 = vpop.f32.mrf.mxu0
    %v717 = vadd.f32 0.0, %v716
    %v718 = vpop.f32.mrf.mxu0
    %v719 = vadd.f32 0.0, %v718
    %720 = vdwg.mxu0
    %721 = vmatpush.bf16.msra.mxu0 0
    %722 = vmatpush.bf16.msra.mxu0 0
    %723 = vmatpush.bf16.msra.mxu0 0
    %724 = vmatpush.bf16.msra.mxu0 0
    %725 = vmatpush.bf16.msra.mxu0 0
    %726 = vmatpush.bf16.msra.mxu0 0
    %727 = vmatpush.bf16.msra.mxu0 0
    %728 = vmatpush.bf16.msra.mxu0 %v394
    %729 = vmatmul.bf16.gmra.mxu0 %v509
    %v730 = vpop.f32.mrf.mxu0
    %v731 = vadd.f32 0.0, %v730
    %v732 = vpop.f32.mrf.mxu0
    %v733 = vadd.f32 0.0, %v732
    %734 = vdwg.mxu0
    %735 = vmatpush.bf16.msra.mxu0 0
    %736 = vmatpush.bf16.msra.mxu0 0
    %737 = vmatpush.bf16.msra.mxu0 0
    %738 = vmatpush.bf16.msra.mxu0 0
    %739 = vmatpush.bf16.msra.mxu0 0
    %740 = vmatpush.bf16.msra.mxu0 0
    %741 = vmatpush.bf16.msra.mxu0 0
    %742 = vmatpush.bf16.msra.mxu0 %v395
    %743 = vmatmul.bf16.gmra.mxu0 %v509
    %v744 = vpop.f32.mrf.mxu0
    %v745 = vadd.f32 0.0, %v744
    %v746 = vpop.f32.mrf.mxu0
    %v747 = vadd.f32 0.0, %v746
    %748 = vdwg.mxu0
    %749 = vmatpush.bf16.msra.mxu0 0
    %750 = vmatpush.bf16.msra.mxu0 0
    %751 = vmatpush.bf16.msra.mxu0 0
    %752 = vmatpush.bf16.msra.mxu0 0
    %753 = vmatpush.bf16.msra.mxu0 0
    %754 = vmatpush.bf16.msra.mxu0 0
    %755 = vmatpush.bf16.msra.mxu0 0
    %756 = vmatpush.bf16.msra.mxu0 %v396
    %757 = vmatmul.bf16.gmra.mxu0 %v509
    %v758 = vpop.f32.mrf.mxu0
    %v759 = vadd.f32 0.0, %v758
    %v760 = vpop.f32.mrf.mxu0
    %v761 = vadd.f32 0.0, %v760
    %762 = vdwg.mxu0
    %763 = vmatpush.bf16.msra.mxu0 0
    %764 = vmatpush.bf16.msra.mxu0 0
    %765 = vmatpush.bf16.msra.mxu0 0
    %766 = vmatpush.bf16.msra.mxu0 0
    %767 = vmatpush.bf16.msra.mxu0 0
    %768 = vmatpush.bf16.msra.mxu0 0
    %769 = vmatpush.bf16.msra.mxu0 0
    %770 = vmatpush.bf16.msra.mxu0 %v397
    %771 = vmatmul.bf16.gmra.mxu0 %v509
    %v772 = vpop.f32.mrf.mxu0
    %v773 = vadd.f32 0.0, %v772
    %v774 = vpop.f32.mrf.mxu0
    %v775 = vadd.f32 0.0, %v774
    %776 = vdwg.mxu0
    %777 = vmatpush.bf16.msra.mxu0 0
    %778 = vmatpush.bf16.msra.mxu0 0
    %779 = vmatpush.bf16.msra.mxu0 0
    %780 = vmatpush.bf16.msra.mxu0 0
    %781 = vmatpush.bf16.msra.mxu0 0
    %782 = vmatpush.bf16.msra.mxu0 0
    %783 = vmatpush.bf16.msra.mxu0 0
    %784 = vmatpush.bf16.msra.mxu0 %v398
    %785 = vmatmul.bf16.gmra.mxu0 %v509
    %v786 = vpop.f32.mrf.mxu0
    %v787 = vadd.f32 0.0, %v786
    %v788 = vpop.f32.mrf.mxu0
    %v789 = vadd.f32 0.0, %v788
    %790 = vdwg.mxu0
    %791 = vmatpush.bf16.msra.mxu0 0
    %792 = vmatpush.bf16.msra.mxu0 0
    %793 = vmatpush.bf16.msra.mxu0 0
    %794 = vmatpush.bf16.msra.mxu0 0
    %795 = vmatpush.bf16.msra.mxu0 0
    %796 = vmatpush.bf16.msra.mxu0 0
    %797 = vmatpush.bf16.msra.mxu0 0
    %798 = vmatpush.bf16.msra.mxu0 %v399
    %799 = vmatmul.bf16.gmra.mxu0 %v509
    %v800 = vpop.f32.mrf.mxu0
    %v801 = vadd.f32 0.0, %v800
    %v802 = vpop.f32.mrf.mxu0
    %v803 = vadd.f32 0.0, %v802
    %804 = vdwg.mxu0
    %805 = vmatpush.bf16.msra.mxu0 0
    %806 = vmatpush.bf16.msra.mxu0 0
    %807 = vmatpush.bf16.msra.mxu0 0
    %808 = vmatpush.bf16.msra.mxu0 0
    %809 = vmatpush.bf16.msra.mxu0 0
    %810 = vmatpush.bf16.msra.mxu0 0
    %811 = vmatpush.bf16.msra.mxu0 0
    %812 = vmatpush.bf16.msra.mxu0 %v400
    %813 = vmatmul.bf16.gmra.mxu0 %v509
    %v814 = vpop.f32.mrf.mxu0
    %v815 = vadd.f32 0.0, %v814
    %v816 = vpop.f32.mrf.mxu0
    %v817 = vadd.f32 0.0, %v816
    %818 = vdwg.mxu0
    %819 = vmatpush.bf16.msra.mxu0 0
    %820 = vmatpush.bf16.msra.mxu0 0
    %821 = vmatpush.bf16.msra.mxu0 0
    %822 = vmatpush.bf16.msra.mxu0 0
    %823 = vmatpush.bf16.msra.mxu0 0
    %824 = vmatpush.bf16.msra.mxu0 0
    %825 = vmatpush.bf16.msra.mxu0 0
    %826 = vmatpush.bf16.msra.mxu0 %v401
    %827 = vmatmul.bf16.gmra.mxu0 %v509
    %v828 = vpop.f32.mrf.mxu0
    %v829 = vadd.f32 0.0, %v828
    %v830 = vpop.f32.mrf.mxu0
    %v831 = vadd.f32 0.0, %v830
    %832 = vdwg.mxu0
    %833 = vmatpush.bf16.msra.mxu0 0
    %834 = vmatpush.bf16.msra.mxu0 0
    %835 = vmatpush.bf16.msra.mxu0 0
    %836 = vmatpush.bf16.msra.mxu0 0
    %837 = vmatpush.bf16.msra.mxu0 0
    %838 = vmatpush.bf16.msra.mxu0 0
    %839 = vmatpush.bf16.msra.mxu0 0
    %840 = vmatpush.bf16.msra.mxu0 %v402
    %841 = vmatmul.bf16.gmra.mxu0 %v509
    %v842 = vpop.f32.mrf.mxu0
    %v843 = vadd.f32 0.0, %v842
    %v844 = vpop.f32.mrf.mxu0
    %v845 = vadd.f32 0.0, %v844
    %846 = vdwg.mxu0
    %847 = vmatpush.bf16.msra.mxu0 0
    %848 = vmatpush.bf16.msra.mxu0 0
    %849 = vmatpush.bf16.msra.mxu0 0
    %850 = vmatpush.bf16.msra.mxu0 0
    %851 = vmatpush.bf16.msra.mxu0 0
    %852 = vmatpush.bf16.msra.mxu0 0
    %853 = vmatpush.bf16.msra.mxu0 0
    %854 = vmatpush.bf16.msra.mxu0 %v403
    %855 = vmatmul.bf16.gmra.mxu0 %v509
    %v856 = vpop.f32.mrf.mxu0
    %v857 = vadd.f32 0.0, %v856
    %v858 = vpop.f32.mrf.mxu0
    %v859 = vadd.f32 0.0, %v858
    %860 = vdwg.mxu0
    %861 = vmatpush.bf16.msra.mxu0 0
    %862 = vmatpush.bf16.msra.mxu0 0
    %863 = vmatpush.bf16.msra.mxu0 0
    %864 = vmatpush.bf16.msra.mxu0 0
    %865 = vmatpush.bf16.msra.mxu0 0
    %866 = vmatpush.bf16.msra.mxu0 0
    %867 = vmatpush.bf16.msra.mxu0 0
    %868 = vmatpush.bf16.msra.mxu0 %v404
    %869 = vmatmul.bf16.gmra.mxu0 %v509
    %v870 = vpop.f32.mrf.mxu0
    %v871 = vadd.f32 0.0, %v870
    %v872 = vpop.f32.mrf.mxu0
    %v873 = vadd.f32 0.0, %v872
    %874 = vdwg.mxu0
    %875 = vmatpush.bf16.msra.mxu0 0
    %876 = vmatpush.bf16.msra.mxu0 0
    %877 = vmatpush.bf16.msra.mxu0 0
    %878 = vmatpush.bf16.msra.mxu0 0
    %879 = vmatpush.bf16.msra.mxu0 0
    %880 = vmatpush.bf16.msra.mxu0 0
    %881 = vmatpush.bf16.msra.mxu0 0
    %882 = vmatpush.bf16.msra.mxu0 %v405
    %883 = vmatmul.bf16.gmra.mxu0 %v509
    %v884 = vpop.f32.mrf.mxu0
    %v885 = vadd.f32 0.0, %v884
    %v886 = vpop.f32.mrf.mxu0
    %v887 = vadd.f32 0.0, %v886
    %888 = vdwg.mxu0
    %889 = vmatpush.bf16.msra.mxu0 0
    %890 = vmatpush.bf16.msra.mxu0 0
    %891 = vmatpush.bf16.msra.mxu0 0
    %892 = vmatpush.bf16.msra.mxu0 0
    %893 = vmatpush.bf16.msra.mxu0 0
    %894 = vmatpush.bf16.msra.mxu0 0
    %895 = vmatpush.bf16.msra.mxu0 0
    %896 = vmatpush.bf16.msra.mxu0 %v406
    %897 = vmatmul.bf16.gmra.mxu0 %v509
    %v898 = vpop.f32.mrf.mxu0
    %v899 = vadd.f32 0.0, %v898
    %v900 = vpop.f32.mrf.mxu0
    %v901 = vadd.f32 0.0, %v900
    %902 = vdwg.mxu0
    %903 = vmatpush.bf16.msra.mxu0 0
    %904 = vmatpush.bf16.msra.mxu0 0
    %905 = vmatpush.bf16.msra.mxu0 0
    %906 = vmatpush.bf16.msra.mxu0 0
    %907 = vmatpush.bf16.msra.mxu0 0
    %908 = vmatpush.bf16.msra.mxu0 0
    %909 = vmatpush.bf16.msra.mxu0 0
    %910 = vmatpush.bf16.msra.mxu0 %v407
    %911 = vmatmul.bf16.gmra.mxu0 %v509
    %v912 = vpop.f32.mrf.mxu0
    %v913 = vadd.f32 0.0, %v912
    %v914 = vpop.f32.mrf.mxu0
    %v915 = vadd.f32 0.0, %v914
    %916 = vdwg.mxu0
    %917 = vmatpush.bf16.msra.mxu0 0
    %918 = vmatpush.bf16.msra.mxu0 0
    %919 = vmatpush.bf16.msra.mxu0 0
    %920 = vmatpush.bf16.msra.mxu0 0
    %921 = vmatpush.bf16.msra.mxu0 0
    %922 = vmatpush.bf16.msra.mxu0 0
    %923 = vmatpush.bf16.msra.mxu0 0
    %924 = vmatpush.bf16.msra.mxu0 %v408
    %925 = vmatmul.bf16.gmra.mxu0 %v509
    %v926 = vpop.f32.mrf.mxu0
    %v927 = vadd.f32 0.0, %v926
    %v928 = vpop.f32.mrf.mxu0
    %v929 = vadd.f32 0.0, %v928
    %930 = vdwg.mxu0
    %931 = vmatpush.bf16.msra.mxu0 0
    %932 = vmatpush.bf16.msra.mxu0 0
    %933 = vmatpush.bf16.msra.mxu0 0
    %934 = vmatpush.bf16.msra.mxu0 0
    %935 = vmatpush.bf16.msra.mxu0 0
    %936 = vmatpush.bf16.msra.mxu0 0
    %937 = vmatpush.bf16.msra.mxu0 0
    %938 = vmatpush.bf16.msra.mxu0 %v409
    %939 = vmatmul.bf16.gmra.mxu0 %v509
    %v940 = vpop.f32.mrf.mxu0
    %v941 = vadd.f32 0.0, %v940
    %v942 = vpop.f32.mrf.mxu0
    %v943 = vadd.f32 0.0, %v942
    %944 = vdwg.mxu0
    %945 = vmatpush.bf16.msra.mxu0 0
    %946 = vmatpush.bf16.msra.mxu0 0
    %947 = vmatpush.bf16.msra.mxu0 0
    %948 = vmatpush.bf16.msra.mxu0 0
    %949 = vmatpush.bf16.msra.mxu0 0
    %950 = vmatpush.bf16.msra.mxu0 0
    %951 = vmatpush.bf16.msra.mxu0 0
    %952 = vmatpush.bf16.msra.mxu0 %v410
    %953 = vmatmul.bf16.gmra.mxu0 %v509
    %v954 = vpop.f32.mrf.mxu0
    %v955 = vadd.f32 0.0, %v954
    %v956 = vpop.f32.mrf.mxu0
    %v957 = vadd.f32 0.0, %v956
    %958 = vdwg.mxu0
    %959 = vmatpush.bf16.msra.mxu0 0
    %960 = vmatpush.bf16.msra.mxu0 0
    %961 = vmatpush.bf16.msra.mxu0 0
    %962 = vmatpush.bf16.msra.mxu0 0
    %963 = vmatpush.bf16.msra.mxu0 0
    %964 = vmatpush.bf16.msra.mxu0 0
    %965 = vmatpush.bf16.msra.mxu0 0
    %966 = vmatpush.bf16.msra.mxu0 %v411
    %967 = vmatmul.bf16.gmra.mxu0 %v509
    %v968 = vpop.f32.mrf.mxu0
    %v969 = vadd.f32 0.0, %v968
    %v970 = vpop.f32.mrf.mxu0
    %v971 = vadd.f32 0.0, %v970
    %972 = vdwg.mxu0
    %973 = vmatpush.bf16.msra.mxu0 0
    %974 = vmatpush.bf16.msra.mxu0 0
    %975 = vmatpush.bf16.msra.mxu0 0
    %976 = vmatpush.bf16.msra.mxu0 0
    %977 = vmatpush.bf16.msra.mxu0 0
    %978 = vmatpush.bf16.msra.mxu0 0
    %979 = vmatpush.bf16.msra.mxu0 0
    %980 = vmatpush.bf16.msra.mxu0 %v412
    %981 = vmatmul.bf16.gmra.mxu0 %v509
    %v982 = vpop.f32.mrf.mxu0
    %v983 = vadd.f32 0.0, %v982
    %v984 = vpop.f32.mrf.mxu0
    %v985 = vadd.f32 0.0, %v984
    %986 = vdwg.mxu0
    %987 = vmatpush.bf16.msra.mxu0 0
    %988 = vmatpush.bf16.msra.mxu0 0
    %989 = vmatpush.bf16.msra.mxu0 0
    %990 = vmatpush.bf16.msra.mxu0 0
    %991 = vmatpush.bf16.msra.mxu0 0
    %992 = vmatpush.bf16.msra.mxu0 0
    %993 = vmatpush.bf16.msra.mxu0 0
    %994 = vmatpush.bf16.msra.mxu0 %v413
    %995 = vmatmul.bf16.gmra.mxu0 %v509
    %v996 = vpop.f32.mrf.mxu0
    %v997 = vadd.f32 0.0, %v996
    %v998 = vpop.f32.mrf.mxu0
    %v999 = vadd.f32 0.0, %v998
    %1000 = vdwg.mxu0
    %1001 = vmatpush.bf16.msra.mxu0 0
    %1002 = vmatpush.bf16.msra.mxu0 0
    %1003 = vmatpush.bf16.msra.mxu0 0
    %1004 = vmatpush.bf16.msra.mxu0 0
    %1005 = vmatpush.bf16.msra.mxu0 0
    %1006 = vmatpush.bf16.msra.mxu0 0
    %1007 = vmatpush.bf16.msra.mxu0 0
    %1008 = vmatpush.bf16.msra.mxu0 %v414
    %1009 = vmatmul.bf16.gmra.mxu0 %v509
    %v1010 = vpop.f32.mrf.mxu0
    %v1011 = vadd.f32 0.0, %v1010
    %v1012 = vpop.f32.mrf.mxu0
    %v1013 = vadd.f32 0.0, %v1012
    %1014 = vdwg.mxu0
    %1015 = vmatpush.bf16.msra.mxu0 0
    %1016 = vmatpush.bf16.msra.mxu0 0
    %1017 = vmatpush.bf16.msra.mxu0 0
    %1018 = vmatpush.bf16.msra.mxu0 0
    %1019 = vmatpush.bf16.msra.mxu0 0
    %1020 = vmatpush.bf16.msra.mxu0 0
    %1021 = vmatpush.bf16.msra.mxu0 0
    %1022 = vmatpush.bf16.msra.mxu0 %v415
    %1023 = vmatmul.bf16.gmra.mxu0 %v509
    %v1024 = vpop.f32.mrf.mxu0
    %v1025 = vadd.f32 0.0, %v1024
    %v1026 = vpop.f32.mrf.mxu0
    %v1027 = vadd.f32 0.0, %v1026
    %1028 = vdwg.mxu0
    %1029 = vmatpush.bf16.msra.mxu0 0
    %1030 = vmatpush.bf16.msra.mxu0 0
    %1031 = vmatpush.bf16.msra.mxu0 0
    %1032 = vmatpush.bf16.msra.mxu0 0
    %1033 = vmatpush.bf16.msra.mxu0 0
    %1034 = vmatpush.bf16.msra.mxu0 0
    %1035 = vmatpush.bf16.msra.mxu0 0
    %1036 = vmatpush.bf16.msra.mxu0 %v416
    %1037 = vmatmul.bf16.gmra.mxu0 %v509
    %v1038 = vpop.f32.mrf.mxu0
    %v1039 = vadd.f32 0.0, %v1038
    %v1040 = vpop.f32.mrf.mxu0
    %v1041 = vadd.f32 0.0, %v1040
    %1042 = vdwg.mxu0
    %1043 = vmatpush.bf16.msra.mxu0 0
    %1044 = vmatpush.bf16.msra.mxu0 0
    %1045 = vmatpush.bf16.msra.mxu0 0
    %1046 = vmatpush.bf16.msra.mxu0 0
    %1047 = vmatpush.bf16.msra.mxu0 0
    %1048 = vmatpush.bf16.msra.mxu0 0
    %1049 = vmatpush.bf16.msra.mxu0 0
    %1050 = vmatpush.bf16.msra.mxu0 %v417
    %1051 = vmatmul.bf16.gmra.mxu0 %v509
    %v1052 = vpop.f32.mrf.mxu0
    %v1053 = vadd.f32 0.0, %v1052
    %v1054 = vpop.f32.mrf.mxu0
    %v1055 = vadd.f32 0.0, %v1054
    %1056 = vdwg.mxu0
    %1057 = vmatpush.bf16.msra.mxu0 0
    %1058 = vmatpush.bf16.msra.mxu0 0
    %1059 = vmatpush.bf16.msra.mxu0 0
    %1060 = vmatpush.bf16.msra.mxu0 0
    %1061 = vmatpush.bf16.msra.mxu0 0
    %1062 = vmatpush.bf16.msra.mxu0 0
    %1063 = vmatpush.bf16.msra.mxu0 0
    %1064 = vmatpush.bf16.msra.mxu0 %v418
    %1065 = vmatmul.bf16.gmra.mxu0 %v509
    %v1066 = vpop.f32.mrf.mxu0
    %v1067 = vadd.f32 0.0, %v1066
    %v1068 = vpop.f32.mrf.mxu0
    %v1069 = vadd.f32 0.0, %v1068
    %1070 = vdwg.mxu0
    %1071 = vmatpush.bf16.msra.mxu0 0
    %1072 = vmatpush.bf16.msra.mxu0 0
    %1073 = vmatpush.bf16.msra.mxu0 0
    %1074 = vmatpush.bf16.msra.mxu0 0
    %1075 = vmatpush.bf16.msra.mxu0 0
    %1076 = vmatpush.bf16.msra.mxu0 0
    %1077 = vmatpush.bf16.msra.mxu0 0
    %1078 = vmatpush.bf16.msra.mxu0 %v419
    %1079 = vmatmul.bf16.gmra.mxu0 %v509
    %v1080 = vpop.f32.mrf.mxu0
    %v1081 = vadd.f32 0.0, %v1080
    %v1082 = vpop.f32.mrf.mxu0
    %v1083 = vadd.f32 0.0, %v1082
    %1084 = vdwg.mxu0
    %1085 = vmatpush.bf16.msra.mxu0 0
    %1086 = vmatpush.bf16.msra.mxu0 0
    %1087 = vmatpush.bf16.msra.mxu0 0
    %1088 = vmatpush.bf16.msra.mxu0 0
    %1089 = vmatpush.bf16.msra.mxu0 0
    %1090 = vmatpush.bf16.msra.mxu0 0
    %1091 = vmatpush.bf16.msra.mxu0 0
    %1092 = vmatpush.bf16.msra.mxu0 %v420
    %1093 = vmatmul.bf16.gmra.mxu0 %v509
    %v1094 = vpop.f32.mrf.mxu0
    %v1095 = vadd.f32 0.0, %v1094
    %v1096 = vpop.f32.mrf.mxu0
    %v1097 = vadd.f32 0.0, %v1096
    %1098 = vdwg.mxu0
    %1099 = vmatpush.bf16.msra.mxu0 0
    %1100 = vmatpush.bf16.msra.mxu0 0
    %1101 = vmatpush.bf16.msra.mxu0 0
    %1102 = vmatpush.bf16.msra.mxu0 0
    %1103 = vmatpush.bf16.msra.mxu0 0
    %1104 = vmatpush.bf16.msra.mxu0 0
    %1105 = vmatpush.bf16.msra.mxu0 0
    %1106 = vmatpush.bf16.msra.mxu0 %v421
    %1107 = vmatmul.bf16.gmra.mxu0 %v509
    %v1108 = vpop.f32.mrf.mxu0
    %v1109 = vadd.f32 0.0, %v1108
    %v1110 = vpop.f32.mrf.mxu0
    %v1111 = vadd.f32 0.0, %v1110
    %1112 = vdwg.mxu0
    %1113 = vmatpush.bf16.msra.mxu0 0
    %1114 = vmatpush.bf16.msra.mxu0 0
    %1115 = vmatpush.bf16.msra.mxu0 0
    %1116 = vmatpush.bf16.msra.mxu0 0
    %1117 = vmatpush.bf16.msra.mxu0 0
    %1118 = vmatpush.bf16.msra.mxu0 0
    %1119 = vmatpush.bf16.msra.mxu0 0
    %1120 = vmatpush.bf16.msra.mxu0 %v422
    %1121 = vmatmul.bf16.gmra.mxu0 %v509
    %v1122 = vpop.f32.mrf.mxu0
    %v1123 = vadd.f32 0.0, %v1122
    %v1124 = vpop.f32.mrf.mxu0
    %v1125 = vadd.f32 0.0, %v1124
    %1126 = vdwg.mxu0
    %1127 = vmatpush.bf16.msra.mxu0 0
    %1128 = vmatpush.bf16.msra.mxu0 0
    %1129 = vmatpush.bf16.msra.mxu0 0
    %1130 = vmatpush.bf16.msra.mxu0 0
    %1131 = vmatpush.bf16.msra.mxu0 0
    %1132 = vmatpush.bf16.msra.mxu0 0
    %1133 = vmatpush.bf16.msra.mxu0 0
    %1134 = vmatpush.bf16.msra.mxu0 %v423
    %1135 = vmatmul.bf16.gmra.mxu0 %v509
    %v1136 = vpop.f32.mrf.mxu0
    %v1137 = vadd.f32 0.0, %v1136
    %v1138 = vpop.f32.mrf.mxu0
    %v1139 = vadd.f32 0.0, %v1138
    %1140 = vdwg.mxu0
    %1141 = vmatpush.bf16.msra.mxu0 0
    %1142 = vmatpush.bf16.msra.mxu0 0
    %1143 = vmatpush.bf16.msra.mxu0 0
    %1144 = vmatpush.bf16.msra.mxu0 0
    %1145 = vmatpush.bf16.msra.mxu0 0
    %1146 = vmatpush.bf16.msra.mxu0 0
    %1147 = vmatpush.bf16.msra.mxu0 0
    %1148 = vmatpush.bf16.msra.mxu0 %v424
    %1149 = vmatmul.bf16.gmra.mxu0 %v509
    %v1150 = vpop.f32.mrf.mxu0
    %v1151 = vadd.f32 0.0, %v1150
    %v1152 = vpop.f32.mrf.mxu0
    %v1153 = vadd.f32 0.0, %v1152
    %1154 = vdwg.mxu0
    %1155 = vmatpush.bf16.msra.mxu0 0
    %1156 = vmatpush.bf16.msra.mxu0 0
    %1157 = vmatpush.bf16.msra.mxu0 0
    %1158 = vmatpush.bf16.msra.mxu0 0
    %1159 = vmatpush.bf16.msra.mxu0 0
    %1160 = vmatpush.bf16.msra.mxu0 0
    %1161 = vmatpush.bf16.msra.mxu0 0
    %1162 = vmatpush.bf16.msra.mxu0 %v425
    %1163 = vmatmul.bf16.gmra.mxu0 %v509
    %v1164 = vpop.f32.mrf.mxu0
    %v1165 = vadd.f32 0.0, %v1164
    %v1166 = vpop.f32.mrf.mxu0
    %v1167 = vadd.f32 0.0, %v1166
    %1168 = vdwg.mxu0
    %1169 = vmatpush.bf16.msra.mxu0 0
    %1170 = vmatpush.bf16.msra.mxu0 0
    %1171 = vmatpush.bf16.msra.mxu0 0
    %1172 = vmatpush.bf16.msra.mxu0 0
    %1173 = vmatpush.bf16.msra.mxu0 0
    %1174 = vmatpush.bf16.msra.mxu0 0
    %1175 = vmatpush.bf16.msra.mxu0 0
    %1176 = vmatpush.bf16.msra.mxu0 %v426
    %1177 = vmatmul.bf16.gmra.mxu0 %v509
    %v1178 = vpop.f32.mrf.mxu0
    %v1179 = vadd.f32 0.0, %v1178
    %v1180 = vpop.f32.mrf.mxu0
    %v1181 = vadd.f32 0.0, %v1180
    %1182 = vdwg.mxu0
    %1183 = vmatpush.bf16.msra.mxu0 0
    %1184 = vmatpush.bf16.msra.mxu0 0
    %1185 = vmatpush.bf16.msra.mxu0 0
    %1186 = vmatpush.bf16.msra.mxu0 0
    %1187 = vmatpush.bf16.msra.mxu0 0
    %1188 = vmatpush.bf16.msra.mxu0 0
    %1189 = vmatpush.bf16.msra.mxu0 0
    %1190 = vmatpush.bf16.msra.mxu0 %v427
    %1191 = vmatmul.bf16.gmra.mxu0 %v509
    %v1192 = vpop.f32.mrf.mxu0
    %v1193 = vadd.f32 0.0, %v1192
    %v1194 = vpop.f32.mrf.mxu0
    %v1195 = vadd.f32 0.0, %v1194
    %1196 = vdwg.mxu0
    %1197 = vmatpush.bf16.msra.mxu0 0
    %1198 = vmatpush.bf16.msra.mxu0 0
    %1199 = vmatpush.bf16.msra.mxu0 0
    %1200 = vmatpush.bf16.msra.mxu0 0
    %1201 = vmatpush.bf16.msra.mxu0 0
    %1202 = vmatpush.bf16.msra.mxu0 0
    %1203 = vmatpush.bf16.msra.mxu0 0
    %1204 = vmatpush.bf16.msra.mxu0 %v428
    %1205 = vmatmul.bf16.gmra.mxu0 %v509
    %v1206 = vpop.f32.mrf.mxu0
    %v1207 = vadd.f32 0.0, %v1206
    %v1208 = vpop.f32.mrf.mxu0
    %v1209 = vadd.f32 0.0, %v1208
    %1210 = vdwg.mxu0
    %1211 = vmatpush.bf16.msra.mxu0 0
    %1212 = vmatpush.bf16.msra.mxu0 0
    %1213 = vmatpush.bf16.msra.mxu0 0
    %1214 = vmatpush.bf16.msra.mxu0 0
    %1215 = vmatpush.bf16.msra.mxu0 0
    %1216 = vmatpush.bf16.msra.mxu0 0
    %1217 = vmatpush.bf16.msra.mxu0 0
    %1218 = vmatpush.bf16.msra.mxu0 %v429
    %1219 = vmatmul.bf16.gmra.mxu0 %v509
    %v1220 = vpop.f32.mrf.mxu0
    %v1221 = vadd.f32 0.0, %v1220
    %v1222 = vpop.f32.mrf.mxu0
    %v1223 = vadd.f32 0.0, %v1222
    %1224 = vdwg.mxu0
    %1225 = vmatpush.bf16.msra.mxu0 0
    %1226 = vmatpush.bf16.msra.mxu0 0
    %1227 = vmatpush.bf16.msra.mxu0 0
    %1228 = vmatpush.bf16.msra.mxu0 0
    %1229 = vmatpush.bf16.msra.mxu0 0
    %1230 = vmatpush.bf16.msra.mxu0 0
    %1231 = vmatpush.bf16.msra.mxu0 0
    %1232 = vmatpush.bf16.msra.mxu0 %v430
    %1233 = vmatmul.bf16.gmra.mxu0 %v509
    %v1234 = vpop.f32.mrf.mxu0
    %v1235 = vadd.f32 0.0, %v1234
    %v1236 = vpop.f32.mrf.mxu0
    %v1237 = vadd.f32 0.0, %v1236
    %1238 = vdwg.mxu0
    %1239 = vmatpush.bf16.msra.mxu0 0
    %1240 = vmatpush.bf16.msra.mxu0 0
    %1241 = vmatpush.bf16.msra.mxu0 0
    %1242 = vmatpush.bf16.msra.mxu0 0
    %1243 = vmatpush.bf16.msra.mxu0 0
    %1244 = vmatpush.bf16.msra.mxu0 0
    %1245 = vmatpush.bf16.msra.mxu0 0
    %1246 = vmatpush.bf16.msra.mxu0 %v431
    %1247 = vmatmul.bf16.gmra.mxu0 %v509
    %v1248 = vpop.f32.mrf.mxu0
    %v1249 = vadd.f32 0.0, %v1248
    %v1250 = vpop.f32.mrf.mxu0
    %v1251 = vadd.f32 0.0, %v1250
    %1252 = vdwg.mxu0
    %1253 = vmatpush.bf16.msra.mxu0 0
    %1254 = vmatpush.bf16.msra.mxu0 0
    %1255 = vmatpush.bf16.msra.mxu0 0
    %1256 = vmatpush.bf16.msra.mxu0 0
    %1257 = vmatpush.bf16.msra.mxu0 0
    %1258 = vmatpush.bf16.msra.mxu0 0
    %1259 = vmatpush.bf16.msra.mxu0 0
    %1260 = vmatpush.bf16.msra.mxu0 %v432
    %1261 = vmatmul.bf16.gmra.mxu0 %v509
    %v1262 = vpop.f32.mrf.mxu0
    %v1263 = vadd.f32 0.0, %v1262
    %v1264 = vpop.f32.mrf.mxu0
    %v1265 = vadd.f32 0.0, %v1264
    %1266 = vdwg.mxu0
    %1267 = vmatpush.bf16.msra.mxu0 0
    %1268 = vmatpush.bf16.msra.mxu0 0
    %1269 = vmatpush.bf16.msra.mxu0 0
    %1270 = vmatpush.bf16.msra.mxu0 0
    %1271 = vmatpush.bf16.msra.mxu0 0
    %1272 = vmatpush.bf16.msra.mxu0 0
    %1273 = vmatpush.bf16.msra.mxu0 0
    %1274 = vmatpush.bf16.msra.mxu0 %v433
    %1275 = vmatmul.bf16.gmra.mxu0 %v509
    %v1276 = vpop.f32.mrf.mxu0
    %v1277 = vadd.f32 0.0, %v1276
    %v1278 = vpop.f32.mrf.mxu0
    %v1279 = vadd.f32 0.0, %v1278
    %1280 = vdwg.mxu0
    %1281 = vmatpush.bf16.msra.mxu0 0
    %1282 = vmatpush.bf16.msra.mxu0 0
    %1283 = vmatpush.bf16.msra.mxu0 0
    %1284 = vmatpush.bf16.msra.mxu0 0
    %1285 = vmatpush.bf16.msra.mxu0 0
    %1286 = vmatpush.bf16.msra.mxu0 0
    %1287 = vmatpush.bf16.msra.mxu0 0
    %1288 = vmatpush.bf16.msra.mxu0 %v434
    %1289 = vmatmul.bf16.gmra.mxu0 %v509
    %v1290 = vpop.f32.mrf.mxu0
    %v1291 = vadd.f32 0.0, %v1290
    %v1292 = vpop.f32.mrf.mxu0
    %v1293 = vadd.f32 0.0, %v1292
    %1294 = vdwg.mxu0
    %1295 = vmatpush.bf16.msra.mxu0 0
    %1296 = vmatpush.bf16.msra.mxu0 0
    %1297 = vmatpush.bf16.msra.mxu0 0
    %1298 = vmatpush.bf16.msra.mxu0 0
    %1299 = vmatpush.bf16.msra.mxu0 0
    %1300 = vmatpush.bf16.msra.mxu0 0
    %1301 = vmatpush.bf16.msra.mxu0 0
    %1302 = vmatpush.bf16.msra.mxu0 %v435
    %1303 = vmatmul.bf16.gmra.mxu0 %v509
    %v1304 = vpop.f32.mrf.mxu0
    %v1305 = vadd.f32 0.0, %v1304
    %v1306 = vpop.f32.mrf.mxu0
    %v1307 = vadd.f32 0.0, %v1306
    %1308 = vdwg.mxu0
    %1309 = vmatpush.bf16.msra.mxu0 0
    %1310 = vmatpush.bf16.msra.mxu0 0
    %1311 = vmatpush.bf16.msra.mxu0 0
    %1312 = vmatpush.bf16.msra.mxu0 0
    %1313 = vmatpush.bf16.msra.mxu0 0
    %1314 = vmatpush.bf16.msra.mxu0 0
    %1315 = vmatpush.bf16.msra.mxu0 0
    %1316 = vmatpush.bf16.msra.mxu0 %v436
    %1317 = vmatmul.bf16.gmra.mxu0 %v509
    %v1318 = vpop.f32.mrf.mxu0
    %v1319 = vadd.f32 0.0, %v1318
    %v1320 = vpop.f32.mrf.mxu0
    %v1321 = vadd.f32 0.0, %v1320
    %1322 = vdwg.mxu0
    %1323 = vmatpush.bf16.msra.mxu0 0
    %1324 = vmatpush.bf16.msra.mxu0 0
    %1325 = vmatpush.bf16.msra.mxu0 0
    %1326 = vmatpush.bf16.msra.mxu0 0
    %1327 = vmatpush.bf16.msra.mxu0 0
    %1328 = vmatpush.bf16.msra.mxu0 0
    %1329 = vmatpush.bf16.msra.mxu0 0
    %1330 = vmatpush.bf16.msra.mxu0 %v437
    %1331 = vmatmul.bf16.gmra.mxu0 %v509
    %v1332 = vpop.f32.mrf.mxu0
    %v1333 = vadd.f32 0.0, %v1332
    %v1334 = vpop.f32.mrf.mxu0
    %v1335 = vadd.f32 0.0, %v1334
    %1336 = vdwg.mxu0
    %1337 = vmatpush.bf16.msra.mxu0 0
    %1338 = vmatpush.bf16.msra.mxu0 0
    %1339 = vmatpush.bf16.msra.mxu0 0
    %1340 = vmatpush.bf16.msra.mxu0 0
    %1341 = vmatpush.bf16.msra.mxu0 0
    %1342 = vmatpush.bf16.msra.mxu0 0
    %1343 = vmatpush.bf16.msra.mxu0 0
    %1344 = vmatpush.bf16.msra.mxu0 %v438
    %1345 = vmatmul.bf16.gmra.mxu0 %v509
    %v1346 = vpop.f32.mrf.mxu0
    %v1347 = vadd.f32 0.0, %v1346
    %v1348 = vpop.f32.mrf.mxu0
    %v1349 = vadd.f32 0.0, %v1348
    %1350 = vdwg.mxu0
    %1351 = vmatpush.bf16.msra.mxu0 0
    %1352 = vmatpush.bf16.msra.mxu0 0
    %1353 = vmatpush.bf16.msra.mxu0 0
    %1354 = vmatpush.bf16.msra.mxu0 0
    %1355 = vmatpush.bf16.msra.mxu0 0
    %1356 = vmatpush.bf16.msra.mxu0 0
    %1357 = vmatpush.bf16.msra.mxu0 0
    %1358 = vmatpush.bf16.msra.mxu0 %v439
    %1359 = vmatmul.bf16.gmra.mxu0 %v509
    %v1360 = vpop.f32.mrf.mxu0
    %v1361 = vadd.f32 0.0, %v1360
    %v1362 = vpop.f32.mrf.mxu0
    %v1363 = vadd.f32 0.0, %v1362
    %1364 = vdwg.mxu0
    %1365 = vmatpush.bf16.msra.mxu0 0
    %1366 = vmatpush.bf16.msra.mxu0 0
    %1367 = vmatpush.bf16.msra.mxu0 0
    %1368 = vmatpush.bf16.msra.mxu0 0
    %1369 = vmatpush.bf16.msra.mxu0 0
    %1370 = vmatpush.bf16.msra.mxu0 0
    %1371 = vmatpush.bf16.msra.mxu0 0
    %1372 = vmatpush.bf16.msra.mxu0 %v440
    %1373 = vmatmul.bf16.gmra.mxu0 %v509
    %v1374 = vpop.f32.mrf.mxu0
    %v1375 = vadd.f32 0.0, %v1374
    %v1376 = vpop.f32.mrf.mxu0
    %v1377 = vadd.f32 0.0, %v1376
    %1378 = vdwg.mxu0
    %1379 = vmatpush.bf16.msra.mxu0 0
    %1380 = vmatpush.bf16.msra.mxu0 0
    %1381 = vmatpush.bf16.msra.mxu0 0
    %1382 = vmatpush.bf16.msra.mxu0 0
    %1383 = vmatpush.bf16.msra.mxu0 0
    %1384 = vmatpush.bf16.msra.mxu0 0
    %1385 = vmatpush.bf16.msra.mxu0 0
    %1386 = vmatpush.bf16.msra.mxu0 %v441
    %1387 = vmatmul.bf16.gmra.mxu0 %v509
    %v1388 = vpop.f32.mrf.mxu0
    %v1389 = vadd.f32 0.0, %v1388
    %v1390 = vpop.f32.mrf.mxu0
    %v1391 = vadd.f32 0.0, %v1390
    %1392 = vdwg.mxu0
    %1393 = vmatpush.bf16.msra.mxu0 0
    %1394 = vmatpush.bf16.msra.mxu0 0
    %1395 = vmatpush.bf16.msra.mxu0 0
    %1396 = vmatpush.bf16.msra.mxu0 0
    %1397 = vmatpush.bf16.msra.mxu0 0
    %1398 = vmatpush.bf16.msra.mxu0 0
    %1399 = vmatpush.bf16.msra.mxu0 0
    %1400 = vmatpush.bf16.msra.mxu0 %v442
    %1401 = vmatmul.bf16.gmra.mxu0 %v509
    %v1402 = vpop.f32.mrf.mxu0
    %v1403 = vadd.f32 0.0, %v1402
    %v1404 = vpop.f32.mrf.mxu0
    %v1405 = vadd.f32 0.0, %v1404
    %1406 = vdwg.mxu0
    %v1407 = vsub.f32 0.0, %v521
    %v1408 = vsub.f32 0.0, %v535
    %v1409 = vsub.f32 0.0, %v549
    %v1410 = vsub.f32 0.0, %v563
    %v1411 = vsub.f32 0.0, %v577
    %v1412 = vsub.f32 0.0, %v591
    %v1413 = vsub.f32 0.0, %v605
    %v1414 = vsub.f32 0.0, %v619
    %v1415 = vsub.f32 0.0, %v633
    %v1416 = vsub.f32 0.0, %v647
    %v1417 = vsub.f32 0.0, %v661
    %v1418 = vsub.f32 0.0, %v675
    %v1419 = vsub.f32 0.0, %v689
    %v1420 = vsub.f32 0.0, %v703
    %v1421 = vsub.f32 0.0, %v717
    %v1422 = vsub.f32 0.0, %v731
    %v1423 = vsub.f32 0.0, %v745
    %v1424 = vsub.f32 0.0, %v759
    %v1425 = vsub.f32 0.0, %v773
    %v1426 = vsub.f32 0.0, %v787
    %v1427 = vsub.f32 0.0, %v801
    %v1428 = vsub.f32 0.0, %v815
    %v1429 = vsub.f32 0.0, %v829
    %v1430 = vsub.f32 0.0, %v843
    %v1431 = vsub.f32 0.0, %v857
    %v1432 = vsub.f32 0.0, %v871
    %v1433 = vsub.f32 0.0, %v885
    %v1434 = vsub.f32 0.0, %v899
    %v1435 = vsub.f32 0.0, %v913
    %v1436 = vsub.f32 0.0, %v927
    %v1437 = vsub.f32 0.0, %v941
    %v1438 = vsub.f32 0.0, %v955
    %v1439 = vsub.f32 0.0, %v523
    %v1440 = vsub.f32 0.0, %v537
    %v1441 = vsub.f32 0.0, %v551
    %v1442 = vsub.f32 0.0, %v565
    %v1443 = vsub.f32 0.0, %v579
    %v1444 = vsub.f32 0.0, %v593
    %v1445 = vsub.f32 0.0, %v607
    %v1446 = vsub.f32 0.0, %v621
    %v1447 = vsub.f32 0.0, %v635
    %v1448 = vsub.f32 0.0, %v649
    %v1449 = vsub.f32 0.0, %v663
    %v1450 = vsub.f32 0.0, %v677
    %v1451 = vsub.f32 0.0, %v691
    %v1452 = vsub.f32 0.0, %v705
    %v1453 = vsub.f32 0.0, %v719
    %v1454 = vsub.f32 0.0, %v733
    %v1455 = vsub.f32 0.0, %v747
    %v1456 = vsub.f32 0.0, %v761
    %v1457 = vsub.f32 0.0, %v775
    %v1458 = vsub.f32 0.0, %v789
    %v1459 = vsub.f32 0.0, %v803
    %v1460 = vsub.f32 0.0, %v817
    %v1461 = vsub.f32 0.0, %v831
    %v1462 = vsub.f32 0.0, %v845
    %v1463 = vsub.f32 0.0, %v859
    %v1464 = vsub.f32 0.0, %v873
    %v1465 = vsub.f32 0.0, %v887
    %v1466 = vsub.f32 0.0, %v901
    %v1467 = vsub.f32 0.0, %v915
    %v1468 = vsub.f32 0.0, %v929
    %v1469 = vsub.f32 0.0, %v943
    %v1470 = vsub.f32 0.0, %v957
    %v1471 = vmul.f32 %v1407, 1.442695
    %v1472 = vpow.pop %v1471
    %v1473 = vmul.f32 %v1408, 1.442695
    %v1474 = vpow.pop %v1473
    %v1475 = vmul.f32 %v1409, 1.442695
    %v1476 = vpow.pop %v1475
    %v1477 = vmul.f32 %v1410, 1.442695
    %v1478 = vpow.pop %v1477
    %v1479 = vmul.f32 %v1411, 1.442695
    %v1480 = vpow.pop %v1479
    %v1481 = vmul.f32 %v1412, 1.442695
    %v1482 = vpow.pop %v1481
    %v1483 = vmul.f32 %v1413, 1.442695
    %v1484 = vpow.pop %v1483
    %v1485 = vmul.f32 %v1414, 1.442695
    %v1486 = vpow.pop %v1485
    %v1487 = vmul.f32 %v1415, 1.442695
    %v1488 = vpow.pop %v1487
    %v1489 = vmul.f32 %v1416, 1.442695
    %v1490 = vpow.pop %v1489
    %v1491 = vmul.f32 %v1417, 1.442695
    %v1492 = vpow.pop %v1491
    %v1493 = vmul.f32 %v1418, 1.442695
    %v1494 = vpow.pop %v1493
    %v1495 = vmul.f32 %v1419, 1.442695
    %v1496 = vpow.pop %v1495
    %v1497 = vmul.f32 %v1420, 1.442695
    %v1498 = vpow.pop %v1497
    %v1499 = vmul.f32 %v1421, 1.442695
    %v1500 = vpow.pop %v1499
    %v1501 = vmul.f32 %v1422, 1.442695
    %v1502 = vpow.pop %v1501
    %v1503 = vmul.f32 %v1423, 1.442695
    %v1504 = vpow.pop %v1503
    %v1505 = vmul.f32 %v1424, 1.442695
    %v1506 = vpow.pop %v1505
    %v1507 = vmul.f32 %v1425, 1.442695
    %v1508 = vpow.pop %v1507
    %v1509 = vmul.f32 %v1426, 1.442695
    %v1510 = vpow.pop %v1509
    %v1511 = vmul.f32 %v1427, 1.442695
    %v1512 = vpow.pop %v1511
    %v1513 = vmul.f32 %v1428, 1.442695
    %v1514 = vpow.pop %v1513
    %v1515 = vmul.f32 %v1429, 1.442695
    %v1516 = vpow.pop %v1515
    %v1517 = vmul.f32 %v1430, 1.442695
    %v1518 = vpow.pop %v1517
    %v1519 = vmul.f32 %v1431, 1.442695
    %v1520 = vpow.pop %v1519
    %v1521 = vmul.f32 %v1432, 1.442695
    %v1522 = vpow.pop %v1521
    %v1523 = vmul.f32 %v1433, 1.442695
    %v1524 = vpow.pop %v1523
    %v1525 = vmul.f32 %v1434, 1.442695
    %v1526 = vpow.pop %v1525
    %v1527 = vmul.f32 %v1435, 1.442695
    %v1528 = vpow.pop %v1527
    %v1529 = vmul.f32 %v1436, 1.442695
    %v1530 = vpow.pop %v1529
    %v1531 = vmul.f32 %v1437, 1.442695
    %v1532 = vpow.pop %v1531
    %v1533 = vmul.f32 %v1438, 1.442695
    %v1534 = vpow.pop %v1533
    %v1535 = vmul.f32 %v1439, 1.442695
    %v1536 = vpow.pop %v1535
    %v1537 = vmul.f32 %v1440, 1.442695
    %v1538 = vpow.pop %v1537
    %v1539 = vmul.f32 %v1441, 1.442695
    %v1540 = vpow.pop %v1539
    %v1541 = vmul.f32 %v1442, 1.442695
    %v1542 = vpow.pop %v1541
    %v1543 = vmul.f32 %v1443, 1.442695
    %v1544 = vpow.pop %v1543
    %v1545 = vmul.f32 %v1444, 1.442695
    %v1546 = vpow.pop %v1545
    %v1547 = vmul.f32 %v1445, 1.442695
    %v1548 = vpow.pop %v1547
    %v1549 = vmul.f32 %v1446, 1.442695
    %v1550 = vpow.pop %v1549
    %v1551 = vmul.f32 %v1447, 1.442695
    %v1552 = vpow.pop %v1551
    %v1553 = vmul.f32 %v1448, 1.442695
    %v1554 = vpow.pop %v1553
    %v1555 = vmul.f32 %v1449, 1.442695
    %v1556 = vpow.pop %v1555
    %v1557 = vmul.f32 %v1450, 1.442695
    %v1558 = vpow.pop %v1557
    %v1559 = vmul.f32 %v1451, 1.442695
    %v1560 = vpow.pop %v1559
    %v1561 = vmul.f32 %v1452, 1.442695
    %v1562 = vpow.pop %v1561
    %v1563 = vmul.f32 %v1453, 1.442695
    %v1564 = vpow.pop %v1563
    %v1565 = vmul.f32 %v1454, 1.442695
    %v1566 = vpow.pop %v1565
    %v1567 = vmul.f32 %v1455, 1.442695
    %v1568 = vpow.pop %v1567
    %v1569 = vmul.f32 %v1456, 1.442695
    %v1570 = vpow.pop %v1569
    %v1571 = vmul.f32 %v1457, 1.442695
    %v1572 = vpow.pop %v1571
    %v1573 = vmul.f32 %v1458, 1.442695
    %v1574 = vpow.pop %v1573
    %v1575 = vmul.f32 %v1459, 1.442695
    %v1576 = vpow.pop %v1575
    %v1577 = vmul.f32 %v1460, 1.442695
    %v1578 = vpow.pop %v1577
    %v1579 = vmul.f32 %v1461, 1.442695
    %v1580 = vpow.pop %v1579
    %v1581 = vmul.f32 %v1462, 1.442695
    %v1582 = vpow.pop %v1581
    %v1583 = vmul.f32 %v1463, 1.442695
    %v1584 = vpow.pop %v1583
    %v1585 = vmul.f32 %v1464, 1.442695
    %v1586 = vpow.pop %v1585
    %v1587 = vmul.f32 %v1465, 1.442695
    %v1588 = vpow.pop %v1587
    %v1589 = vmul.f32 %v1466, 1.442695
    %v1590 = vpow.pop %v1589
    %v1591 = vmul.f32 %v1467, 1.442695
    %v1592 = vpow.pop %v1591
    %v1593 = vmul.f32 %v1468, 1.442695
    %v1594 = vpow.pop %v1593
    %v1595 = vmul.f32 %v1469, 1.442695
    %v1596 = vpow.pop %v1595
    %v1597 = vmul.f32 %v1470, 1.442695
    %v1598 = vpow.pop %v1597
    %v1599 = vadd.f32 %v1472, 1.0
    %v1600 = vadd.f32 %v1474, 1.0
    %v1601 = vadd.f32 %v1476, 1.0
    %v1602 = vadd.f32 %v1478, 1.0
    %v1603 = vadd.f32 %v1480, 1.0
    %v1604 = vadd.f32 %v1482, 1.0
    %v1605 = vadd.f32 %v1484, 1.0
    %v1606 = vadd.f32 %v1486, 1.0
    %v1607 = vadd.f32 %v1488, 1.0
    %v1608 = vadd.f32 %v1490, 1.0
    %v1609 = vadd.f32 %v1492, 1.0
    %v1610 = vadd.f32 %v1494, 1.0
    %v1611 = vadd.f32 %v1496, 1.0
    %v1612 = vadd.f32 %v1498, 1.0
    %v1613 = vadd.f32 %v1500, 1.0
    %v1614 = vadd.f32 %v1502, 1.0
    %v1615 = vadd.f32 %v1504, 1.0
    %v1616 = vadd.f32 %v1506, 1.0
    %v1617 = vadd.f32 %v1508, 1.0
    %v1618 = vadd.f32 %v1510, 1.0
    %v1619 = vadd.f32 %v1512, 1.0
    %v1620 = vadd.f32 %v1514, 1.0
    %v1621 = vadd.f32 %v1516, 1.0
    %v1622 = vadd.f32 %v1518, 1.0
    %v1623 = vadd.f32 %v1520, 1.0
    %v1624 = vadd.f32 %v1522, 1.0
    %v1625 = vadd.f32 %v1524, 1.0
    %v1626 = vadd.f32 %v1526, 1.0
    %v1627 = vadd.f32 %v1528, 1.0
    %v1628 = vadd.f32 %v1530, 1.0
    %v1629 = vadd.f32 %v1532, 1.0
    %v1630 = vadd.f32 %v1534, 1.0
    %v1631 = vadd.f32 %v1536, 1.0
    %v1632 = vadd.f32 %v1538, 1.0
    %v1633 = vadd.f32 %v1540, 1.0
    %v1634 = vadd.f32 %v1542, 1.0
    %v1635 = vadd.f32 %v1544, 1.0
    %v1636 = vadd.f32 %v1546, 1.0
    %v1637 = vadd.f32 %v1548, 1.0
    %v1638 = vadd.f32 %v1550, 1.0
    %v1639 = vadd.f32 %v1552, 1.0
    %v1640 = vadd.f32 %v1554, 1.0
    %v1641 = vadd.f32 %v1556, 1.0
    %v1642 = vadd.f32 %v1558, 1.0
    %v1643 = vadd.f32 %v1560, 1.0
    %v1644 = vadd.f32 %v1562, 1.0
    %v1645 = vadd.f32 %v1564, 1.0
    %v1646 = vadd.f32 %v1566, 1.0
    %v1647 = vadd.f32 %v1568, 1.0
    %v1648 = vadd.f32 %v1570, 1.0
    %v1649 = vadd.f32 %v1572, 1.0
    %v1650 = vadd.f32 %v1574, 1.0
    %v1651 = vadd.f32 %v1576, 1.0
    %v1652 = vadd.f32 %v1578, 1.0
    %v1653 = vadd.f32 %v1580, 1.0
    %v1654 = vadd.f32 %v1582, 1.0
    %v1655 = vadd.f32 %v1584, 1.0
    %v1656 = vadd.f32 %v1586, 1.0
    %v1657 = vadd.f32 %v1588, 1.0
    %v1658 = vadd.f32 %v1590, 1.0
    %v1659 = vadd.f32 %v1592, 1.0
    %v1660 = vadd.f32 %v1594, 1.0
    %v1661 = vadd.f32 %v1596, 1.0
    %v1662 = vadd.f32 %v1598, 1.0
    %v1663 = vrcp.pop %v1599
    %v1664 = vrcp.pop %v1600
    %v1665 = vrcp.pop %v1601
    %v1666 = vrcp.pop %v1602
    %v1667 = vrcp.pop %v1603
    %v1668 = vrcp.pop %v1604
    %v1669 = vrcp.pop %v1605
    %v1670 = vrcp.pop %v1606
    %v1671 = vrcp.pop %v1607
    %v1672 = vrcp.pop %v1608
    %v1673 = vrcp.pop %v1609
    %v1674 = vrcp.pop %v1610
    %v1675 = vrcp.pop %v1611
    %v1676 = vrcp.pop %v1612
    %v1677 = vrcp.pop %v1613
    %v1678 = vrcp.pop %v1614
    %v1679 = vrcp.pop %v1615
    %v1680 = vrcp.pop %v1616
    %v1681 = vrcp.pop %v1617
    %v1682 = vrcp.pop %v1618
    %v1683 = vrcp.pop %v1619
    %v1684 = vrcp.pop %v1620
    %v1685 = vrcp.pop %v1621
    %v1686 = vrcp.pop %v1622
    %v1687 = vrcp.pop %v1623
    %v1688 = vrcp.pop %v1624
    %v1689 = vrcp.pop %v1625
    %v1690 = vrcp.pop %v1626
    %v1691 = vrcp.pop %v1627
    %v1692 = vrcp.pop %v1628
    %v1693 = vrcp.pop %v1629
    %v1694 = vrcp.pop %v1630
    %v1695 = vrcp.pop %v1631
    %v1696 = vrcp.pop %v1632
    %v1697 = vrcp.pop %v1633
    %v1698 = vrcp.pop %v1634
    %v1699 = vrcp.pop %v1635
    %v1700 = vrcp.pop %v1636
    %v1701 = vrcp.pop %v1637
    %v1702 = vrcp.pop %v1638
    %v1703 = vrcp.pop %v1639
    %v1704 = vrcp.pop %v1640
    %v1705 = vrcp.pop %v1641
    %v1706 = vrcp.pop %v1642
    %v1707 = vrcp.pop %v1643
    %v1708 = vrcp.pop %v1644
    %v1709 = vrcp.pop %v1645
    %v1710 = vrcp.pop %v1646
    %v1711 = vrcp.pop %v1647
    %v1712 = vrcp.pop %v1648
    %v1713 = vrcp.pop %v1649
    %v1714 = vrcp.pop %v1650
    %v1715 = vrcp.pop %v1651
    %v1716 = vrcp.pop %v1652
    %v1717 = vrcp.pop %v1653
    %v1718 = vrcp.pop %v1654
    %v1719 = vrcp.pop %v1655
    %v1720 = vrcp.pop %v1656
    %v1721 = vrcp.pop %v1657
    %v1722 = vrcp.pop %v1658
    %v1723 = vrcp.pop %v1659
    %v1724 = vrcp.pop %v1660
    %v1725 = vrcp.pop %v1661
    %v1726 = vrcp.pop %v1662
    %v1727 = vmul.f32 %v521, %v1663
    %v1728 = vmul.f32 %v535, %v1664
    %v1729 = vmul.f32 %v549, %v1665
    %v1730 = vmul.f32 %v563, %v1666
    %v1731 = vmul.f32 %v577, %v1667
    %v1732 = vmul.f32 %v591, %v1668
    %v1733 = vmul.f32 %v605, %v1669
    %v1734 = vmul.f32 %v619, %v1670
    %v1735 = vmul.f32 %v633, %v1671
    %v1736 = vmul.f32 %v647, %v1672
    %v1737 = vmul.f32 %v661, %v1673
    %v1738 = vmul.f32 %v675, %v1674
    %v1739 = vmul.f32 %v689, %v1675
    %v1740 = vmul.f32 %v703, %v1676
    %v1741 = vmul.f32 %v717, %v1677
    %v1742 = vmul.f32 %v731, %v1678
    %v1743 = vmul.f32 %v745, %v1679
    %v1744 = vmul.f32 %v759, %v1680
    %v1745 = vmul.f32 %v773, %v1681
    %v1746 = vmul.f32 %v787, %v1682
    %v1747 = vmul.f32 %v801, %v1683
    %v1748 = vmul.f32 %v815, %v1684
    %v1749 = vmul.f32 %v829, %v1685
    %v1750 = vmul.f32 %v843, %v1686
    %v1751 = vmul.f32 %v857, %v1687
    %v1752 = vmul.f32 %v871, %v1688
    %v1753 = vmul.f32 %v885, %v1689
    %v1754 = vmul.f32 %v899, %v1690
    %v1755 = vmul.f32 %v913, %v1691
    %v1756 = vmul.f32 %v927, %v1692
    %v1757 = vmul.f32 %v941, %v1693
    %v1758 = vmul.f32 %v955, %v1694
    %v1759 = vmul.f32 %v523, %v1695
    %v1760 = vmul.f32 %v537, %v1696
    %v1761 = vmul.f32 %v551, %v1697
    %v1762 = vmul.f32 %v565, %v1698
    %v1763 = vmul.f32 %v579, %v1699
    %v1764 = vmul.f32 %v593, %v1700
    %v1765 = vmul.f32 %v607, %v1701
    %v1766 = vmul.f32 %v621, %v1702
    %v1767 = vmul.f32 %v635, %v1703
    %v1768 = vmul.f32 %v649, %v1704
    %v1769 = vmul.f32 %v663, %v1705
    %v1770 = vmul.f32 %v677, %v1706
    %v1771 = vmul.f32 %v691, %v1707
    %v1772 = vmul.f32 %v705, %v1708
    %v1773 = vmul.f32 %v719, %v1709
    %v1774 = vmul.f32 %v733, %v1710
    %v1775 = vmul.f32 %v747, %v1711
    %v1776 = vmul.f32 %v761, %v1712
    %v1777 = vmul.f32 %v775, %v1713
    %v1778 = vmul.f32 %v789, %v1714
    %v1779 = vmul.f32 %v803, %v1715
    %v1780 = vmul.f32 %v817, %v1716
    %v1781 = vmul.f32 %v831, %v1717
    %v1782 = vmul.f32 %v845, %v1718
    %v1783 = vmul.f32 %v859, %v1719
    %v1784 = vmul.f32 %v873, %v1720
    %v1785 = vmul.f32 %v887, %v1721
    %v1786 = vmul.f32 %v901, %v1722
    %v1787 = vmul.f32 %v915, %v1723
    %v1788 = vmul.f32 %v929, %v1724
    %v1789 = vmul.f32 %v943, %v1725
    %v1790 = vmul.f32 %v957, %v1726
    %v1791 = vmul.f32 %v1727, %v969
    %v1792 = vmul.f32 %v1728, %v983
    %v1793 = vmul.f32 %v1729, %v997
    %v1794 = vmul.f32 %v1730, %v1011
    %v1795 = vmul.f32 %v1731, %v1025
    %v1796 = vmul.f32 %v1732, %v1039
    %v1797 = vmul.f32 %v1733, %v1053
    %v1798 = vmul.f32 %v1734, %v1067
    %v1799 = vmul.f32 %v1735, %v1081
    %v1800 = vmul.f32 %v1736, %v1095
    %v1801 = vmul.f32 %v1737, %v1109
    %v1802 = vmul.f32 %v1738, %v1123
    %v1803 = vmul.f32 %v1739, %v1137
    %v1804 = vmul.f32 %v1740, %v1151
    %v1805 = vmul.f32 %v1741, %v1165
    %v1806 = vmul.f32 %v1742, %v1179
    %v1807 = vmul.f32 %v1743, %v1193
    %v1808 = vmul.f32 %v1744, %v1207
    %v1809 = vmul.f32 %v1745, %v1221
    %v1810 = vmul.f32 %v1746, %v1235
    %v1811 = vmul.f32 %v1747, %v1249
    %v1812 = vmul.f32 %v1748, %v1263
    %v1813 = vmul.f32 %v1749, %v1277
    %v1814 = vmul.f32 %v1750, %v1291
    %v1815 = vmul.f32 %v1751, %v1305
    %v1816 = vmul.f32 %v1752, %v1319
    %v1817 = vmul.f32 %v1753, %v1333
    %v1818 = vmul.f32 %v1754, %v1347
    %v1819 = vmul.f32 %v1755, %v1361
    %v1820 = vmul.f32 %v1756, %v1375
    %v1821 = vmul.f32 %v1757, %v1389
    %v1822 = vmul.f32 %v1758, %v1403
    %v1823 = vmul.f32 %v1759, %v971
    %v1824 = vmul.f32 %v1760, %v985
    %v1825 = vmul.f32 %v1761, %v999
    %v1826 = vmul.f32 %v1762, %v1013
    %v1827 = vmul.f32 %v1763, %v1027
    %v1828 = vmul.f32 %v1764, %v1041
    %v1829 = vmul.f32 %v1765, %v1055
    %v1830 = vmul.f32 %v1766, %v1069
    %v1831 = vmul.f32 %v1767, %v1083
    %v1832 = vmul.f32 %v1768, %v1097
    %v1833 = vmul.f32 %v1769, %v1111
    %v1834 = vmul.f32 %v1770, %v1125
    %v1835 = vmul.f32 %v1771, %v1139
    %v1836 = vmul.f32 %v1772, %v1153
    %v1837 = vmul.f32 %v1773, %v1167
    %v1838 = vmul.f32 %v1774, %v1181
    %v1839 = vmul.f32 %v1775, %v1195
    %v1840 = vmul.f32 %v1776, %v1209
    %v1841 = vmul.f32 %v1777, %v1223
    %v1842 = vmul.f32 %v1778, %v1237
    %v1843 = vmul.f32 %v1779, %v1251
    %v1844 = vmul.f32 %v1780, %v1265
    %v1845 = vmul.f32 %v1781, %v1279
    %v1846 = vmul.f32 %v1782, %v1293
    %v1847 = vmul.f32 %v1783, %v1307
    %v1848 = vmul.f32 %v1784, %v1321
    %v1849 = vmul.f32 %v1785, %v1335
    %v1850 = vmul.f32 %v1786, %v1349
    %v1851 = vmul.f32 %v1787, %v1363
    %v1852 = vmul.f32 %v1788, %v1377
    %v1853 = vmul.f32 %v1789, %v1391
    %v1854 = vmul.f32 %v1790, %v1405
    %v1855 = vpack.c.bf16 %v1823, %v1791
    %v1856 = vpack.c.bf16 %v1824, %v1792
    %v1857 = vpack.c.bf16 %v1825, %v1793
    %v1858 = vpack.c.bf16 %v1826, %v1794
    %v1859 = vpack.c.bf16 %v1827, %v1795
    %v1860 = vpack.c.bf16 %v1828, %v1796
    %v1861 = vpack.c.bf16 %v1829, %v1797
    %v1862 = vpack.c.bf16 %v1830, %v1798
    %v1863 = vpack.c.bf16 %v1831, %v1799
    %v1864 = vpack.c.bf16 %v1832, %v1800
    %v1865 = vpack.c.bf16 %v1833, %v1801
    %v1866 = vpack.c.bf16 %v1834, %v1802
    %v1867 = vpack.c.bf16 %v1835, %v1803
    %v1868 = vpack.c.bf16 %v1836, %v1804
    %v1869 = vpack.c.bf16 %v1837, %v1805
    %v1870 = vpack.c.bf16 %v1838, %v1806
    %v1871 = vpack.c.bf16 %v1839, %v1807
    %v1872 = vpack.c.bf16 %v1840, %v1808
    %v1873 = vpack.c.bf16 %v1841, %v1809
    %v1874 = vpack.c.bf16 %v1842, %v1810
    %v1875 = vpack.c.bf16 %v1843, %v1811
    %v1876 = vpack.c.bf16 %v1844, %v1812
    %v1877 = vpack.c.bf16 %v1845, %v1813
    %v1878 = vpack.c.bf16 %v1846, %v1814
    %v1879 = vpack.c.bf16 %v1847, %v1815
    %v1880 = vpack.c.bf16 %v1848, %v1816
    %v1881 = vpack.c.bf16 %v1849, %v1817
    %v1882 = vpack.c.bf16 %v1850, %v1818
    %v1883 = vpack.c.bf16 %v1851, %v1819
    %v1884 = vpack.c.bf16 %v1852, %v1820
    %v1885 = vpack.c.bf16 %v1853, %v1821
    %v1886 = vpack.c.bf16 %v1854, %v1822
    %v1919 = vunpack.c.l.b16 %v148
    %v1920 = vunpack.c.h.b16 %v148
    %v1921 = vunpack.c.l.b16 %v149
    %v1922 = vunpack.c.h.b16 %v149
    %v1923 = vunpack.c.l.b16 %v150
    %v1924 = vunpack.c.h.b16 %v150
    %v1925 = vunpack.c.l.b16 %v151
    %v1926 = vunpack.c.h.b16 %v151
    %v1927 = vunpack.c.l.b16 %v152
    %v1928 = vunpack.c.h.b16 %v152
    %v1929 = vunpack.c.l.b16 %v153
    %v1930 = vunpack.c.h.b16 %v153
    %v1931 = vunpack.c.l.b16 %v154
    %v1932 = vunpack.c.h.b16 %v154
    %v1933 = vunpack.c.l.b16 %v155
    %v1934 = vunpack.c.h.b16 %v155
    %v1935 = vunpack.c.l.b16 %v156
    %v1936 = vunpack.c.h.b16 %v156
    %v1937 = vunpack.c.l.b16 %v157
    %v1938 = vunpack.c.h.b16 %v157
    %v1939 = vunpack.c.l.b16 %v158
    %v1940 = vunpack.c.h.b16 %v158
    %v1941 = vunpack.c.l.b16 %v159
    %v1942 = vunpack.c.h.b16 %v159
    %v1943 = vunpack.c.l.b16 %v160
    %v1944 = vunpack.c.h.b16 %v160
    %v1945 = vunpack.c.l.b16 %v161
    %v1946 = vunpack.c.h.b16 %v161
    %v1947 = vunpack.c.l.b16 %v162
    %v1948 = vunpack.c.h.b16 %v162
    %v1949 = vunpack.c.l.b16 %v163
    %v1950 = vunpack.c.h.b16 %v163
    %v1951 = vunpack.c.l.b16 %v164
    %v1952 = vunpack.c.h.b16 %v164
    %v1953 = vunpack.c.l.b16 %v165
    %v1954 = vunpack.c.h.b16 %v165
    %v1955 = vunpack.c.l.b16 %v166
    %v1956 = vunpack.c.h.b16 %v166
    %v1957 = vunpack.c.l.b16 %v167
    %v1958 = vunpack.c.h.b16 %v167
    %v1959 = vunpack.c.l.b16 %v168
    %v1960 = vunpack.c.h.b16 %v168
    %v1961 = vunpack.c.l.b16 %v169
    %v1962 = vunpack.c.h.b16 %v169
    %v1963 = vunpack.c.l.b16 %v170
    %v1964 = vunpack.c.h.b16 %v170
    %v1965 = vunpack.c.l.b16 %v171
    %v1966 = vunpack.c.h.b16 %v171
    %v1967 = vunpack.c.l.b16 %v172
    %v1968 = vunpack.c.h.b16 %v172
    %v1969 = vunpack.c.l.b16 %v173
    %v1970 = vunpack.c.h.b16 %v173
    %v1971 = vunpack.c.l.b16 %v174
    %v1972 = vunpack.c.h.b16 %v174
    %v1973 = vunpack.c.l.b16 %v175
    %v1974 = vunpack.c.h.b16 %v175
    %v1975 = vunpack.c.l.b16 %v176
    %v1976 = vunpack.c.h.b16 %v176
    %v1977 = vunpack.c.l.b16 %v177
    %v1978 = vunpack.c.h.b16 %v177
    %v1979 = vunpack.c.l.b16 %v178
    %v1980 = vunpack.c.h.b16 %v178
    %v1981 = vunpack.c.l.b16 %v179
    %v1982 = vunpack.c.h.b16 %v179
    %v1983 = vpack.c.b16 %v1951, %v1919
    %v1984 = vpack.c.b16 %v1952, %v1920
    %v1985 = vpack.c.b16 %v1953, %v1921
    %v1986 = vpack.c.b16 %v1954, %v1922
    %v1987 = vpack.c.b16 %v1955, %v1923
    %v1988 = vpack.c.b16 %v1956, %v1924
    %v1989 = vpack.c.b16 %v1957, %v1925
    %v1990 = vpack.c.b16 %v1958, %v1926
    %v1991 = vpack.c.b16 %v1959, %v1927
    %v1992 = vpack.c.b16 %v1960, %v1928
    %v1993 = vpack.c.b16 %v1961, %v1929
    %v1994 = vpack.c.b16 %v1962, %v1930
    %v1995 = vpack.c.b16 %v1963, %v1931
    %v1996 = vpack.c.b16 %v1964, %v1932
    %v1997 = vpack.c.b16 %v1965, %v1933
    %v1998 = vpack.c.b16 %v1966, %v1934
    %v1999 = vpack.c.b16 %v1967, %v1935
    %v2000 = vpack.c.b16 %v1968, %v1936
    %v2001 = vpack.c.b16 %v1969, %v1937
    %v2002 = vpack.c.b16 %v1970, %v1938
    %v2003 = vpack.c.b16 %v1971, %v1939
    %v2004 = vpack.c.b16 %v1972, %v1940
    %v2005 = vpack.c.b16 %v1973, %v1941
    %v2006 = vpack.c.b16 %v1974, %v1942
    %v2007 = vpack.c.b16 %v1975, %v1943
    %v2008 = vpack.c.b16 %v1976, %v1944
    %v2009 = vpack.c.b16 %v1977, %v1945
    %v2010 = vpack.c.b16 %v1978, %v1946
    %v2011 = vpack.c.b16 %v1979, %v1947
    %v2012 = vpack.c.b16 %v1980, %v1948
    %v2013 = vpack.c.b16 %v1981, %v1949
    %v2014 = vpack.c.b16 %v1982, %v1950
    %2047 = vmatpush.bf16.xpose.msra.mxu0 0
    %2048 = vmatpush.bf16.xpose.msra.mxu0 0
    %2049 = vmatpush.bf16.xpose.msra.mxu0 0
    %2050 = vmatpush.bf16.xpose.msra.mxu0 0
    %2051 = vmatpush.bf16.xpose.msra.mxu0 0
    %2052 = vmatpush.bf16.xpose.msra.mxu0 0
    %2053 = vmatpush.bf16.xpose.msra.mxu0 0
    %2054 = vmatpush.bf16.xpose.msra.mxu0 %v1983
    %2055 = vmatmul.bf16.gmra.mxu0 %v1855
    %v2056 = vpop.f32.mrf.mxu0
    %v2057 = vadd.f32 0.0, %v2056
    %v2058 = vpop.f32.mrf.mxu0
    %v2059 = vadd.f32 0.0, %v2058
    %2060 = vdwg.mxu0
    %2061 = vmatpush.bf16.xpose.msra.mxu0 0
    %2062 = vmatpush.bf16.xpose.msra.mxu0 0
    %2063 = vmatpush.bf16.xpose.msra.mxu0 0
    %2064 = vmatpush.bf16.xpose.msra.mxu0 0
    %2065 = vmatpush.bf16.xpose.msra.mxu0 0
    %2066 = vmatpush.bf16.xpose.msra.mxu0 0
    %2067 = vmatpush.bf16.xpose.msra.mxu0 0
    %2068 = vmatpush.bf16.xpose.msra.mxu0 %v1984
    %2069 = vmatmul.bf16.gmra.mxu0 %v1856
    %v2070 = vpop.f32.mrf.mxu0
    %v2071 = vadd.f32 %v2057, %v2070
    %v2072 = vpop.f32.mrf.mxu0
    %v2073 = vadd.f32 %v2059, %v2072
    %2074 = vdwg.mxu0
    %2075 = vmatpush.bf16.xpose.msra.mxu0 0
    %2076 = vmatpush.bf16.xpose.msra.mxu0 0
    %2077 = vmatpush.bf16.xpose.msra.mxu0 0
    %2078 = vmatpush.bf16.xpose.msra.mxu0 0
    %2079 = vmatpush.bf16.xpose.msra.mxu0 0
    %2080 = vmatpush.bf16.xpose.msra.mxu0 0
    %2081 = vmatpush.bf16.xpose.msra.mxu0 0
    %2082 = vmatpush.bf16.xpose.msra.mxu0 %v1985
    %2083 = vmatmul.bf16.gmra.mxu0 %v1857
    %v2084 = vpop.f32.mrf.mxu0
    %v2085 = vadd.f32 %v2071, %v2084
    %v2086 = vpop.f32.mrf.mxu0
    %v2087 = vadd.f32 %v2073, %v2086
    %2088 = vdwg.mxu0
    %2089 = vmatpush.bf16.xpose.msra.mxu0 0
    %2090 = vmatpush.bf16.xpose.msra.mxu0 0
    %2091 = vmatpush.bf16.xpose.msra.mxu0 0
    %2092 = vmatpush.bf16.xpose.msra.mxu0 0
    %2093 = vmatpush.bf16.xpose.msra.mxu0 0
    %2094 = vmatpush.bf16.xpose.msra.mxu0 0
    %2095 = vmatpush.bf16.xpose.msra.mxu0 0
    %2096 = vmatpush.bf16.xpose.msra.mxu0 %v1986
    %2097 = vmatmul.bf16.gmra.mxu0 %v1858
    %v2098 = vpop.f32.mrf.mxu0
    %v2099 = vadd.f32 %v2085, %v2098
    %v2100 = vpop.f32.mrf.mxu0
    %v2101 = vadd.f32 %v2087, %v2100
    %2102 = vdwg.mxu0
    %2103 = vmatpush.bf16.xpose.msra.mxu0 0
    %2104 = vmatpush.bf16.xpose.msra.mxu0 0
    %2105 = vmatpush.bf16.xpose.msra.mxu0 0
    %2106 = vmatpush.bf16.xpose.msra.mxu0 0
    %2107 = vmatpush.bf16.xpose.msra.mxu0 0
    %2108 = vmatpush.bf16.xpose.msra.mxu0 0
    %2109 = vmatpush.bf16.xpose.msra.mxu0 0
    %2110 = vmatpush.bf16.xpose.msra.mxu0 %v1987
    %2111 = vmatmul.bf16.gmra.mxu0 %v1859
    %v2112 = vpop.f32.mrf.mxu0
    %v2113 = vadd.f32 %v2099, %v2112
    %v2114 = vpop.f32.mrf.mxu0
    %v2115 = vadd.f32 %v2101, %v2114
    %2116 = vdwg.mxu0
    %2117 = vmatpush.bf16.xpose.msra.mxu0 0
    %2118 = vmatpush.bf16.xpose.msra.mxu0 0
    %2119 = vmatpush.bf16.xpose.msra.mxu0 0
    %2120 = vmatpush.bf16.xpose.msra.mxu0 0
    %2121 = vmatpush.bf16.xpose.msra.mxu0 0
    %2122 = vmatpush.bf16.xpose.msra.mxu0 0
    %2123 = vmatpush.bf16.xpose.msra.mxu0 0
    %2124 = vmatpush.bf16.xpose.msra.mxu0 %v1988
    %2125 = vmatmul.bf16.gmra.mxu0 %v1860
    %v2126 = vpop.f32.mrf.mxu0
    %v2127 = vadd.f32 %v2113, %v2126
    %v2128 = vpop.f32.mrf.mxu0
    %v2129 = vadd.f32 %v2115, %v2128
    %2130 = vdwg.mxu0
    %2131 = vmatpush.bf16.xpose.msra.mxu0 0
    %2132 = vmatpush.bf16.xpose.msra.mxu0 0
    %2133 = vmatpush.bf16.xpose.msra.mxu0 0
    %2134 = vmatpush.bf16.xpose.msra.mxu0 0
    %2135 = vmatpush.bf16.xpose.msra.mxu0 0
    %2136 = vmatpush.bf16.xpose.msra.mxu0 0
    %2137 = vmatpush.bf16.xpose.msra.mxu0 0
    %2138 = vmatpush.bf16.xpose.msra.mxu0 %v1989
    %2139 = vmatmul.bf16.gmra.mxu0 %v1861
    %v2140 = vpop.f32.mrf.mxu0
    %v2141 = vadd.f32 %v2127, %v2140
    %v2142 = vpop.f32.mrf.mxu0
    %v2143 = vadd.f32 %v2129, %v2142
    %2144 = vdwg.mxu0
    %2145 = vmatpush.bf16.xpose.msra.mxu0 0
    %2146 = vmatpush.bf16.xpose.msra.mxu0 0
    %2147 = vmatpush.bf16.xpose.msra.mxu0 0
    %2148 = vmatpush.bf16.xpose.msra.mxu0 0
    %2149 = vmatpush.bf16.xpose.msra.mxu0 0
    %2150 = vmatpush.bf16.xpose.msra.mxu0 0
    %2151 = vmatpush.bf16.xpose.msra.mxu0 0
    %2152 = vmatpush.bf16.xpose.msra.mxu0 %v1990
    %2153 = vmatmul.bf16.gmra.mxu0 %v1862
    %v2154 = vpop.f32.mrf.mxu0
    %v2155 = vadd.f32 %v2141, %v2154
    %v2156 = vpop.f32.mrf.mxu0
    %v2157 = vadd.f32 %v2143, %v2156
    %2158 = vdwg.mxu0
    %2159 = vmatpush.bf16.xpose.msra.mxu0 0
    %2160 = vmatpush.bf16.xpose.msra.mxu0 0
    %2161 = vmatpush.bf16.xpose.msra.mxu0 0
    %2162 = vmatpush.bf16.xpose.msra.mxu0 0
    %2163 = vmatpush.bf16.xpose.msra.mxu0 0
    %2164 = vmatpush.bf16.xpose.msra.mxu0 0
    %2165 = vmatpush.bf16.xpose.msra.mxu0 0
    %2166 = vmatpush.bf16.xpose.msra.mxu0 %v1991
    %2167 = vmatmul.bf16.gmra.mxu0 %v1863
    %v2168 = vpop.f32.mrf.mxu0
    %v2169 = vadd.f32 %v2155, %v2168
    %v2170 = vpop.f32.mrf.mxu0
    %v2171 = vadd.f32 %v2157, %v2170
    %2172 = vdwg.mxu0
    %2173 = vmatpush.bf16.xpose.msra.mxu0 0
    %2174 = vmatpush.bf16.xpose.msra.mxu0 0
    %2175 = vmatpush.bf16.xpose.msra.mxu0 0
    %2176 = vmatpush.bf16.xpose.msra.mxu0 0
    %2177 = vmatpush.bf16.xpose.msra.mxu0 0
    %2178 = vmatpush.bf16.xpose.msra.mxu0 0
    %2179 = vmatpush.bf16.xpose.msra.mxu0 0
    %2180 = vmatpush.bf16.xpose.msra.mxu0 %v1992
    %2181 = vmatmul.bf16.gmra.mxu0 %v1864
    %v2182 = vpop.f32.mrf.mxu0
    %v2183 = vadd.f32 %v2169, %v2182
    %v2184 = vpop.f32.mrf.mxu0
    %v2185 = vadd.f32 %v2171, %v2184
    %2186 = vdwg.mxu0
    %2187 = vmatpush.bf16.xpose.msra.mxu0 0
    %2188 = vmatpush.bf16.xpose.msra.mxu0 0
    %2189 = vmatpush.bf16.xpose.msra.mxu0 0
    %2190 = vmatpush.bf16.xpose.msra.mxu0 0
    %2191 = vmatpush.bf16.xpose.msra.mxu0 0
    %2192 = vmatpush.bf16.xpose.msra.mxu0 0
    %2193 = vmatpush.bf16.xpose.msra.mxu0 0
    %2194 = vmatpush.bf16.xpose.msra.mxu0 %v1993
    %2195 = vmatmul.bf16.gmra.mxu0 %v1865
    %v2196 = vpop.f32.mrf.mxu0
    %v2197 = vadd.f32 %v2183, %v2196
    %v2198 = vpop.f32.mrf.mxu0
    %v2199 = vadd.f32 %v2185, %v2198
    %2200 = vdwg.mxu0
    %2201 = vmatpush.bf16.xpose.msra.mxu0 0
    %2202 = vmatpush.bf16.xpose.msra.mxu0 0
    %2203 = vmatpush.bf16.xpose.msra.mxu0 0
    %2204 = vmatpush.bf16.xpose.msra.mxu0 0
    %2205 = vmatpush.bf16.xpose.msra.mxu0 0
    %2206 = vmatpush.bf16.xpose.msra.mxu0 0
    %2207 = vmatpush.bf16.xpose.msra.mxu0 0
    %2208 = vmatpush.bf16.xpose.msra.mxu0 %v1994
    %2209 = vmatmul.bf16.gmra.mxu0 %v1866
    %v2210 = vpop.f32.mrf.mxu0
    %v2211 = vadd.f32 %v2197, %v2210
    %v2212 = vpop.f32.mrf.mxu0
    %v2213 = vadd.f32 %v2199, %v2212
    %2214 = vdwg.mxu0
    %2215 = vmatpush.bf16.xpose.msra.mxu0 0
    %2216 = vmatpush.bf16.xpose.msra.mxu0 0
    %2217 = vmatpush.bf16.xpose.msra.mxu0 0
    %2218 = vmatpush.bf16.xpose.msra.mxu0 0
    %2219 = vmatpush.bf16.xpose.msra.mxu0 0
    %2220 = vmatpush.bf16.xpose.msra.mxu0 0
    %2221 = vmatpush.bf16.xpose.msra.mxu0 0
    %2222 = vmatpush.bf16.xpose.msra.mxu0 %v1995
    %2223 = vmatmul.bf16.gmra.mxu0 %v1867
    %v2224 = vpop.f32.mrf.mxu0
    %v2225 = vadd.f32 %v2211, %v2224
    %v2226 = vpop.f32.mrf.mxu0
    %v2227 = vadd.f32 %v2213, %v2226
    %2228 = vdwg.mxu0
    %2229 = vmatpush.bf16.xpose.msra.mxu0 0
    %2230 = vmatpush.bf16.xpose.msra.mxu0 0
    %2231 = vmatpush.bf16.xpose.msra.mxu0 0
    %2232 = vmatpush.bf16.xpose.msra.mxu0 0
    %2233 = vmatpush.bf16.xpose.msra.mxu0 0
    %2234 = vmatpush.bf16.xpose.msra.mxu0 0
    %2235 = vmatpush.bf16.xpose.msra.mxu0 0
    %2236 = vmatpush.bf16.xpose.msra.mxu0 %v1996
    %2237 = vmatmul.bf16.gmra.mxu0 %v1868
    %v2238 = vpop.f32.mrf.mxu0
    %v2239 = vadd.f32 %v2225, %v2238
    %v2240 = vpop.f32.mrf.mxu0
    %v2241 = vadd.f32 %v2227, %v2240
    %2242 = vdwg.mxu0
    %2243 = vmatpush.bf16.xpose.msra.mxu0 0
    %2244 = vmatpush.bf16.xpose.msra.mxu0 0
    %2245 = vmatpush.bf16.xpose.msra.mxu0 0
    %2246 = vmatpush.bf16.xpose.msra.mxu0 0
    %2247 = vmatpush.bf16.xpose.msra.mxu0 0
    %2248 = vmatpush.bf16.xpose.msra.mxu0 0
    %2249 = vmatpush.bf16.xpose.msra.mxu0 0
    %2250 = vmatpush.bf16.xpose.msra.mxu0 %v1997
    %2251 = vmatmul.bf16.gmra.mxu0 %v1869
    %v2252 = vpop.f32.mrf.mxu0
    %v2253 = vadd.f32 %v2239, %v2252
    %v2254 = vpop.f32.mrf.mxu0
    %v2255 = vadd.f32 %v2241, %v2254
    %2256 = vdwg.mxu0
    %2257 = vmatpush.bf16.xpose.msra.mxu0 0
    %2258 = vmatpush.bf16.xpose.msra.mxu0 0
    %2259 = vmatpush.bf16.xpose.msra.mxu0 0
    %2260 = vmatpush.bf16.xpose.msra.mxu0 0
    %2261 = vmatpush.bf16.xpose.msra.mxu0 0
    %2262 = vmatpush.bf16.xpose.msra.mxu0 0
    %2263 = vmatpush.bf16.xpose.msra.mxu0 0
    %2264 = vmatpush.bf16.xpose.msra.mxu0 %v1998
    %2265 = vmatmul.bf16.gmra.mxu0 %v1870
    %v2266 = vpop.f32.mrf.mxu0
    %v2267 = vadd.f32 %v2253, %v2266
    %v2268 = vpop.f32.mrf.mxu0
    %v2269 = vadd.f32 %v2255, %v2268
    %2270 = vdwg.mxu0
    %2271 = vmatpush.bf16.xpose.msra.mxu0 0
    %2272 = vmatpush.bf16.xpose.msra.mxu0 0
    %2273 = vmatpush.bf16.xpose.msra.mxu0 0
    %2274 = vmatpush.bf16.xpose.msra.mxu0 0
    %2275 = vmatpush.bf16.xpose.msra.mxu0 0
    %2276 = vmatpush.bf16.xpose.msra.mxu0 0
    %2277 = vmatpush.bf16.xpose.msra.mxu0 0
    %2278 = vmatpush.bf16.xpose.msra.mxu0 %v1999
    %2279 = vmatmul.bf16.gmra.mxu0 %v1871
    %v2280 = vpop.f32.mrf.mxu0
    %v2281 = vadd.f32 %v2267, %v2280
    %v2282 = vpop.f32.mrf.mxu0
    %v2283 = vadd.f32 %v2269, %v2282
    %2284 = vdwg.mxu0
    %2285 = vmatpush.bf16.xpose.msra.mxu0 0
    %2286 = vmatpush.bf16.xpose.msra.mxu0 0
    %2287 = vmatpush.bf16.xpose.msra.mxu0 0
    %2288 = vmatpush.bf16.xpose.msra.mxu0 0
    %2289 = vmatpush.bf16.xpose.msra.mxu0 0
    %2290 = vmatpush.bf16.xpose.msra.mxu0 0
    %2291 = vmatpush.bf16.xpose.msra.mxu0 0
    %2292 = vmatpush.bf16.xpose.msra.mxu0 %v2000
    %2293 = vmatmul.bf16.gmra.mxu0 %v1872
    %v2294 = vpop.f32.mrf.mxu0
    %v2295 = vadd.f32 %v2281, %v2294
    %v2296 = vpop.f32.mrf.mxu0
    %v2297 = vadd.f32 %v2283, %v2296
    %2298 = vdwg.mxu0
    %2299 = vmatpush.bf16.xpose.msra.mxu0 0
    %2300 = vmatpush.bf16.xpose.msra.mxu0 0
    %2301 = vmatpush.bf16.xpose.msra.mxu0 0
    %2302 = vmatpush.bf16.xpose.msra.mxu0 0
    %2303 = vmatpush.bf16.xpose.msra.mxu0 0
    %2304 = vmatpush.bf16.xpose.msra.mxu0 0
    %2305 = vmatpush.bf16.xpose.msra.mxu0 0
    %2306 = vmatpush.bf16.xpose.msra.mxu0 %v2001
    %2307 = vmatmul.bf16.gmra.mxu0 %v1873
    %v2308 = vpop.f32.mrf.mxu0
    %v2309 = vadd.f32 %v2295, %v2308
    %v2310 = vpop.f32.mrf.mxu0
    %v2311 = vadd.f32 %v2297, %v2310
    %2312 = vdwg.mxu0
    %2313 = vmatpush.bf16.xpose.msra.mxu0 0
    %2314 = vmatpush.bf16.xpose.msra.mxu0 0
    %2315 = vmatpush.bf16.xpose.msra.mxu0 0
    %2316 = vmatpush.bf16.xpose.msra.mxu0 0
    %2317 = vmatpush.bf16.xpose.msra.mxu0 0
    %2318 = vmatpush.bf16.xpose.msra.mxu0 0
    %2319 = vmatpush.bf16.xpose.msra.mxu0 0
    %2320 = vmatpush.bf16.xpose.msra.mxu0 %v2002
    %2321 = vmatmul.bf16.gmra.mxu0 %v1874
    %v2322 = vpop.f32.mrf.mxu0
    %v2323 = vadd.f32 %v2309, %v2322
    %v2324 = vpop.f32.mrf.mxu0
    %v2325 = vadd.f32 %v2311, %v2324
    %2326 = vdwg.mxu0
    %2327 = vmatpush.bf16.xpose.msra.mxu0 0
    %2328 = vmatpush.bf16.xpose.msra.mxu0 0
    %2329 = vmatpush.bf16.xpose.msra.mxu0 0
    %2330 = vmatpush.bf16.xpose.msra.mxu0 0
    %2331 = vmatpush.bf16.xpose.msra.mxu0 0
    %2332 = vmatpush.bf16.xpose.msra.mxu0 0
    %2333 = vmatpush.bf16.xpose.msra.mxu0 0
    %2334 = vmatpush.bf16.xpose.msra.mxu0 %v2003
    %2335 = vmatmul.bf16.gmra.mxu0 %v1875
    %v2336 = vpop.f32.mrf.mxu0
    %v2337 = vadd.f32 %v2323, %v2336
    %v2338 = vpop.f32.mrf.mxu0
    %v2339 = vadd.f32 %v2325, %v2338
    %2340 = vdwg.mxu0
    %2341 = vmatpush.bf16.xpose.msra.mxu0 0
    %2342 = vmatpush.bf16.xpose.msra.mxu0 0
    %2343 = vmatpush.bf16.xpose.msra.mxu0 0
    %2344 = vmatpush.bf16.xpose.msra.mxu0 0
    %2345 = vmatpush.bf16.xpose.msra.mxu0 0
    %2346 = vmatpush.bf16.xpose.msra.mxu0 0
    %2347 = vmatpush.bf16.xpose.msra.mxu0 0
    %2348 = vmatpush.bf16.xpose.msra.mxu0 %v2004
    %2349 = vmatmul.bf16.gmra.mxu0 %v1876
    %v2350 = vpop.f32.mrf.mxu0
    %v2351 = vadd.f32 %v2337, %v2350
    %v2352 = vpop.f32.mrf.mxu0
    %v2353 = vadd.f32 %v2339, %v2352
    %2354 = vdwg.mxu0
    %2355 = vmatpush.bf16.xpose.msra.mxu0 0
    %2356 = vmatpush.bf16.xpose.msra.mxu0 0
    %2357 = vmatpush.bf16.xpose.msra.mxu0 0
    %2358 = vmatpush.bf16.xpose.msra.mxu0 0
    %2359 = vmatpush.bf16.xpose.msra.mxu0 0
    %2360 = vmatpush.bf16.xpose.msra.mxu0 0
    %2361 = vmatpush.bf16.xpose.msra.mxu0 0
    %2362 = vmatpush.bf16.xpose.msra.mxu0 %v2005
    %2363 = vmatmul.bf16.gmra.mxu0 %v1877
    %v2364 = vpop.f32.mrf.mxu0
    %v2365 = vadd.f32 %v2351, %v2364
    %v2366 = vpop.f32.mrf.mxu0
    %v2367 = vadd.f32 %v2353, %v2366
    %2368 = vdwg.mxu0
    %2369 = vmatpush.bf16.xpose.msra.mxu0 0
    %2370 = vmatpush.bf16.xpose.msra.mxu0 0
    %2371 = vmatpush.bf16.xpose.msra.mxu0 0
    %2372 = vmatpush.bf16.xpose.msra.mxu0 0
    %2373 = vmatpush.bf16.xpose.msra.mxu0 0
    %2374 = vmatpush.bf16.xpose.msra.mxu0 0
    %2375 = vmatpush.bf16.xpose.msra.mxu0 0
    %2376 = vmatpush.bf16.xpose.msra.mxu0 %v2006
    %2377 = vmatmul.bf16.gmra.mxu0 %v1878
    %v2378 = vpop.f32.mrf.mxu0
    %v2379 = vadd.f32 %v2365, %v2378
    %v2380 = vpop.f32.mrf.mxu0
    %v2381 = vadd.f32 %v2367, %v2380
    %2382 = vdwg.mxu0
    %2383 = vmatpush.bf16.xpose.msra.mxu0 0
    %2384 = vmatpush.bf16.xpose.msra.mxu0 0
    %2385 = vmatpush.bf16.xpose.msra.mxu0 0
    %2386 = vmatpush.bf16.xpose.msra.mxu0 0
    %2387 = vmatpush.bf16.xpose.msra.mxu0 0
    %2388 = vmatpush.bf16.xpose.msra.mxu0 0
    %2389 = vmatpush.bf16.xpose.msra.mxu0 0
    %2390 = vmatpush.bf16.xpose.msra.mxu0 %v2007
    %2391 = vmatmul.bf16.gmra.mxu0 %v1879
    %v2392 = vpop.f32.mrf.mxu0
    %v2393 = vadd.f32 %v2379, %v2392
    %v2394 = vpop.f32.mrf.mxu0
    %v2395 = vadd.f32 %v2381, %v2394
    %2396 = vdwg.mxu0
    %2397 = vmatpush.bf16.xpose.msra.mxu0 0
    %2398 = vmatpush.bf16.xpose.msra.mxu0 0
    %2399 = vmatpush.bf16.xpose.msra.mxu0 0
    %2400 = vmatpush.bf16.xpose.msra.mxu0 0
    %2401 = vmatpush.bf16.xpose.msra.mxu0 0
    %2402 = vmatpush.bf16.xpose.msra.mxu0 0
    %2403 = vmatpush.bf16.xpose.msra.mxu0 0
    %2404 = vmatpush.bf16.xpose.msra.mxu0 %v2008
    %2405 = vmatmul.bf16.gmra.mxu0 %v1880
    %v2406 = vpop.f32.mrf.mxu0
    %v2407 = vadd.f32 %v2393, %v2406
    %v2408 = vpop.f32.mrf.mxu0
    %v2409 = vadd.f32 %v2395, %v2408
    %2410 = vdwg.mxu0
    %2411 = vmatpush.bf16.xpose.msra.mxu0 0
    %2412 = vmatpush.bf16.xpose.msra.mxu0 0
    %2413 = vmatpush.bf16.xpose.msra.mxu0 0
    %2414 = vmatpush.bf16.xpose.msra.mxu0 0
    %2415 = vmatpush.bf16.xpose.msra.mxu0 0
    %2416 = vmatpush.bf16.xpose.msra.mxu0 0
    %2417 = vmatpush.bf16.xpose.msra.mxu0 0
    %2418 = vmatpush.bf16.xpose.msra.mxu0 %v2009
    %2419 = vmatmul.bf16.gmra.mxu0 %v1881
    %v2420 = vpop.f32.mrf.mxu0
    %v2421 = vadd.f32 %v2407, %v2420
    %v2422 = vpop.f32.mrf.mxu0
    %v2423 = vadd.f32 %v2409, %v2422
    %2424 = vdwg.mxu0
    %2425 = vmatpush.bf16.xpose.msra.mxu0 0
    %2426 = vmatpush.bf16.xpose.msra.mxu0 0
    %2427 = vmatpush.bf16.xpose.msra.mxu0 0
    %2428 = vmatpush.bf16.xpose.msra.mxu0 0
    %2429 = vmatpush.bf16.xpose.msra.mxu0 0
    %2430 = vmatpush.bf16.xpose.msra.mxu0 0
    %2431 = vmatpush.bf16.xpose.msra.mxu0 0
    %2432 = vmatpush.bf16.xpose.msra.mxu0 %v2010
    %2433 = vmatmul.bf16.gmra.mxu0 %v1882
    %v2434 = vpop.f32.mrf.mxu0
    %v2435 = vadd.f32 %v2421, %v2434
    %v2436 = vpop.f32.mrf.mxu0
    %v2437 = vadd.f32 %v2423, %v2436
    %2438 = vdwg.mxu0
    %2439 = vmatpush.bf16.xpose.msra.mxu0 0
    %2440 = vmatpush.bf16.xpose.msra.mxu0 0
    %2441 = vmatpush.bf16.xpose.msra.mxu0 0
    %2442 = vmatpush.bf16.xpose.msra.mxu0 0
    %2443 = vmatpush.bf16.xpose.msra.mxu0 0
    %2444 = vmatpush.bf16.xpose.msra.mxu0 0
    %2445 = vmatpush.bf16.xpose.msra.mxu0 0
    %2446 = vmatpush.bf16.xpose.msra.mxu0 %v2011
    %2447 = vmatmul.bf16.gmra.mxu0 %v1883
    %v2448 = vpop.f32.mrf.mxu0
    %v2449 = vadd.f32 %v2435, %v2448
    %v2450 = vpop.f32.mrf.mxu0
    %v2451 = vadd.f32 %v2437, %v2450
    %2452 = vdwg.mxu0
    %2453 = vmatpush.bf16.xpose.msra.mxu0 0
    %2454 = vmatpush.bf16.xpose.msra.mxu0 0
    %2455 = vmatpush.bf16.xpose.msra.mxu0 0
    %2456 = vmatpush.bf16.xpose.msra.mxu0 0
    %2457 = vmatpush.bf16.xpose.msra.mxu0 0
    %2458 = vmatpush.bf16.xpose.msra.mxu0 0
    %2459 = vmatpush.bf16.xpose.msra.mxu0 0
    %2460 = vmatpush.bf16.xpose.msra.mxu0 %v2012
    %2461 = vmatmul.bf16.gmra.mxu0 %v1884
    %v2462 = vpop.f32.mrf.mxu0
    %v2463 = vadd.f32 %v2449, %v2462
    %v2464 = vpop.f32.mrf.mxu0
    %v2465 = vadd.f32 %v2451, %v2464
    %2466 = vdwg.mxu0
    %2467 = vmatpush.bf16.xpose.msra.mxu0 0
    %2468 = vmatpush.bf16.xpose.msra.mxu0 0
    %2469 = vmatpush.bf16.xpose.msra.mxu0 0
    %2470 = vmatpush.bf16.xpose.msra.mxu0 0
    %2471 = vmatpush.bf16.xpose.msra.mxu0 0
    %2472 = vmatpush.bf16.xpose.msra.mxu0 0
    %2473 = vmatpush.bf16.xpose.msra.mxu0 0
    %2474 = vmatpush.bf16.xpose.msra.mxu0 %v2013
    %2475 = vmatmul.bf16.gmra.mxu0 %v1885
    %v2476 = vpop.f32.mrf.mxu0
    %v2477 = vadd.f32 %v2463, %v2476
    %v2478 = vpop.f32.mrf.mxu0
    %v2479 = vadd.f32 %v2465, %v2478
    %2480 = vdwg.mxu0
    %2481 = vmatpush.bf16.xpose.msra.mxu0 0
    %2482 = vmatpush.bf16.xpose.msra.mxu0 0
    %2483 = vmatpush.bf16.xpose.msra.mxu0 0
    %2484 = vmatpush.bf16.xpose.msra.mxu0 0
    %2485 = vmatpush.bf16.xpose.msra.mxu0 0
    %2486 = vmatpush.bf16.xpose.msra.mxu0 0
    %2487 = vmatpush.bf16.xpose.msra.mxu0 0
    %2488 = vmatpush.bf16.xpose.msra.mxu0 %v2014
    %2489 = vmatmul.bf16.gmra.mxu0 %v1886
    %v2490 = vpop.f32.mrf.mxu0
    %v2491 = vadd.f32 %v2477, %v2490
    %v2492 = vpop.f32.mrf.mxu0
    %v2493 = vadd.f32 %v2479, %v2492
    %2494 = vdwg.mxu0
    %v2495 = vld [vmem:[#allocation8] sm:$0xff]
    %v2496 = vld [vmem:[#allocation8 + $0x8] sm:$0xff]
    %v2497 = vadd.f32 %v2495, %v2491
    %v2498 = vadd.f32 %v2496, %v2493
    %2499 = vst.msk [vmem:[#allocation8] sm:$0xff] %vm507, %v2497
    %2500 = vst.msk [vmem:[#allocation8 + $0x8] sm:$0xff] %vm507, %v2498
    // Predicated region
    $region30: #{tpu_custom_call.1} parent=1 // pred_check
      _
    $region31: #{tpu_custom_call.1} parent=1 // pred_check_branch
      %2502 = sbr.rel (0) target = $region33
    $region32: #{tpu_custom_call.1} parent=1 // pred_region
      %2504 = vsyncadd [#allocation4], 0
      %s2505 = sshll.u32 [#allocation8], 4
      %s2506 = int_to_ptr.vmem [resolvable:$true] %s2505
      %s2507 = sshll.u32 %s3, 4
      %s2508 = int_to_ptr.hbm [resolvable:$true] %s2507
      %2513 = dma.vmem_to_hbm [thread:$0]  %s2506, 256, %s2508, [#allocation4], 128, 128, 8
    $region33: #{tpu_custom_call.1} parent=1 // pred_fallthru
      _
    // Predicated region
    $region34: #{tpu_custom_call.1} parent=1 // pred_check
      _
    $region35: #{tpu_custom_call.1} parent=1 // pred_check_branch
      %2515 = sbr.rel (0) target = $region37
    $region36: #{tpu_custom_call.1} parent=1 // pred_region
      %2517 = dma.done [#allocation4], 256
    $region37: #{tpu_custom_call.1} parent=1 // pred_fallthru
      _
    %2518 = vsyncpa [#allocation3], 1
    %2519 = vsyncpa [#allocation6], 1
    %2520 = vsyncpa [#allocation4], 1

</llo_original>
